<compile_context>
chip_gen: v6e
topology: v6e:2x2x1
jax: 0.10.0
libtpu: 0.0.40
codegen_flags: <defaults>
</compile_context>

<pallas_src>
from functools import partial

import numpy as np
import jax
import jax.numpy as jnp
from jax.experimental import pallas as pl
from jax.experimental.pallas import tpu as pltpu


def _lidar_cost_kernel(qT_ref, pts_ref, pnorm_ref, featsT_ref, out_ref,
                       *, k, cw, hw, bw, lim):
    qT = qT_ref[...]                      # (3, TN)  queries on lanes
    qx = qT[0:1, :]                       # (1, TN)
    qy = qT[1:2, :]
    qz = qT[2:3, :]

    # squared distance up to a per-query constant:  |p|^2 - 2 <q, p>
    # (the dropped |q|^2 term does not change the k-NN selection)
    scores = pnorm_ref[...] - 2.0 * jnp.dot(
        pts_ref[...], qT, preferred_element_type=jnp.float32)       # (M, TN)

    # k-th smallest score per query via k successive argmin-and-mask steps.
    # min is over the SUBLANE axis (rows = dataset points).
    BIG = jnp.float32(3.0e38)
    d = scores
    kth = None
    for _ in range(k):                    # k is a small compile-time constant
        kth = jnp.min(d, axis=0, keepdims=True)          # (1, TN)
        d = jnp.where(d <= kth, BIG, d)
    mask = (scores <= kth).astype(jnp.float32)           # (M, TN), k ones/col

    # Normal equations of the (unweighted) plane fit as one MXU matmul:
    # mom = [x^2, xy, x, y^2, y, 1, xz, yz, z]^T-features  @  mask
    mom = jnp.dot(featsT_ref[...], mask,
                  preferred_element_type=jnp.float32)    # (9, TN)
    Sxx, Sxy, Sx = mom[0:1, :], mom[1:2, :], mom[2:3, :]
    Syy, Sy, S1 = mom[3:4, :], mom[4:5, :], mom[5:6, :]
    Sxz, Syz, Sz = mom[6:7, :], mom[7:8, :], mom[8:9, :]

    # Cramer's rule for the symmetric 3x3 system A w = rhs, all (1, TN) rows
    det = (Sxx * (Syy * S1 - Sy * Sy)
           - Sxy * (Sxy * S1 - Sy * Sx)
           + Sx * (Sxy * Sy - Syy * Sx))
    det_a = (Sxz * (Syy * S1 - Sy * Sy)
             - Sxy * (Syz * S1 - Sy * Sz)
             + Sx * (Syz * Sy - Syy * Sz))
    det_b = (Sxx * (Syz * S1 - Sy * Sz)
             - Sxz * (Sxy * S1 - Sy * Sx)
             + Sx * (Sxy * Sz - Syz * Sx))
    det_c = (Sxx * (Syy * Sz - Syz * Sy)
             - Sxy * (Sxy * Sz - Syz * Sx)
             + Sxz * (Sxy * Sy - Syy * Sx))
    inv_det = pl.reciprocal(det, approx=True)
    a = det_a * inv_det
    b = det_b * inv_det
    c = det_c * inv_det

    # projection onto the plane with normal n = [a, b, -1], offset d = c
    pn = a * qx + b * qy - qz
    nn = a * a + b * b + 1.0
    t = (pn + c) * pl.reciprocal(nn, approx=True)
    closeness = t * t * nn                # ||proj(x) - x||^2
    proj_z = qz + t                       # z - t * n_z, n_z = -1
    height = jnp.exp(proj_z)

    def bpen(v):
        return (jax.nn.sigmoid((v - lim) / 0.1)
                + 1.0 - jax.nn.sigmoid((v + lim) / 0.1))

    boundary = bpen(qx) + bpen(qy)

    out_ref[...] = cw * closeness + hw * height + bw * boundary     # (1, TN)


def lidar_state_cost(xt, dataset, *, k=8, closeness_weight=1.0,
                     height_weight=1.0, boundary_weight=1.0, tile_n=512):
    """JAX/Pallas equivalent of LIDARStateCost.forward."""
    shape = xt.shape[:-1]
    assert xt.shape[-1] == 3
    N = int(np.prod(shape))
    q = xt.reshape(N, 3).astype(jnp.float32)

    # lane-aligned tile size; keep >= 2 grid steps when N allows so both
    # TensorCores on v7x get work (harmless on v5e/v6e)
    tile_n = max(128, (int(tile_n) // 128) * 128)
    while tile_n > 128 and pl.cdiv(N, tile_n) < 2:
        tile_n //= 2
    n_grid = pl.cdiv(N, tile_n)
    n_pad = n_grid * tile_n

    # queries transposed onto lanes: (3, n_pad)
    qT = jnp.zeros((3, n_pad), jnp.float32).at[:, :N].set(q.T)

    pts = dataset.astype(jnp.float32)                    # (M, 3)
    M = pts.shape[0]
    assert k >= 1 and k <= M
    pnorm = jnp.sum(pts * pts, axis=-1, keepdims=True)   # (M, 1)
    px, py, pz = pts[:, 0], pts[:, 1], pts[:, 2]
    featsT = jnp.stack([px * px, px * py, px,
                        py * py, py, jnp.ones_like(px),
                        px * pz, py * pz, pz], axis=0)   # (9, M)

    kernel = partial(_lidar_cost_kernel, k=int(k),
                     cw=float(closeness_weight), hw=float(height_weight),
                     bw=float(boundary_weight), lim=5.0)

    out = pl.pallas_call(
        kernel,
        out_shape=jax.ShapeDtypeStruct((1, n_pad), jnp.float32),
        grid_spec=pltpu.PrefetchScalarGridSpec(
            num_scalar_prefetch=0,
            grid=(n_grid,),
            in_specs=[
                pl.BlockSpec((3, tile_n), lambda i: (0, i)),   # queries
                pl.BlockSpec((M, 3), lambda i: (0, 0)),        # dataset pts
                pl.BlockSpec((M, 1), lambda i: (0, 0)),        # |p|^2
                pl.BlockSpec((9, M), lambda i: (0, 0)),        # plane features
            ],
            out_specs=pl.BlockSpec((1, tile_n), lambda i: (0, i)),
        ),
        compiler_params=pltpu.CompilerParams(
            dimension_semantics=("parallel",)),
    )(qT, pts, pnorm, featsT)

    return out[0, :N].reshape(shape)


def _reference(xt, dataset, *, k, cw, hw, bw, lim=5.0):
    """NumPy port of the PyTorch forward (brute-force exact KNN)."""
    shape = xt.shape[:-1]
    N = int(np.prod(shape))
    q = np.asarray(xt, np.float64).reshape(N, 3)
    P = np.asarray(dataset, np.float64)
    d2 = ((q[:, None, :] - P[None, :, :]) ** 2).sum(-1)
    idx = np.argsort(d2, axis=-1)[:, :k]
    near = P[idx]                                        # (N, k, 3)
    D = np.concatenate([near[..., :2], np.ones_like(near[..., 2:3])], axis=-1)
    z = near[..., 2:3]
    A = np.einsum('nki,nkj->nij', D, D)                  # (N, 3, 3)
    rhs = np.einsum('nki,nkj->nij', D, z)                # (N, 3, 1)
    w = np.linalg.solve(A, rhs)[..., 0]                  # (N, 3) = [a, b, c]
    a, b, c = w[:, 0], w[:, 1], w[:, 2]
    n = np.stack([a, b, -np.ones_like(a)], -1)
    pn = (q * n).sum(-1)
    nn = (n * n).sum(-1)
    t = (pn + c) / nn
    closeness = t * t * nn
    proj_z = q[:, 2] + t
    height = np.exp(proj_z)
    sig = lambda v: 1.0 / (1.0 + np.exp(-v))
    bpen = lambda v: sig((v - lim) / 0.1) + 1.0 - sig((v + lim) / 0.1)
    boundary = bpen(q[:, 0]) + bpen(q[:, 1])
    return (cw * closeness + hw * height + bw * boundary).reshape(shape)


if __name__ == "__main__":
    key = jax.random.PRNGKey(0)
    k_xy, k_noise, k_qxy, k_qz = jax.random.split(key, 4)

    # Synthetic "ground" LIDAR dataset inside the normalized box
    # [-5, 5] x [-5, 5] x [0, 2] (mirrors the normalization in __init__).
    M = 256
    xy = jax.random.uniform(k_xy, (M, 2), minval=-5.0, maxval=5.0)
    zz = (1.0 + 0.5 * jnp.sin(0.7 * xy[:, 0:1]) * jnp.cos(0.5 * xy[:, 1:2])
          + 0.05 * jax.random.normal(k_noise, (M, 1)))
    dataset = jnp.concatenate([xy, zz], axis=-1)         # (256, 3)

    # Query trajectory: xt shape (2, 128, 3)
    B, S = 2, 128
    q_xy = jax.random.uniform(k_qxy, (B, S, 2), minval=-4.5, maxval=4.5)
    q_z = jax.random.uniform(k_qz, (B, S, 1), minval=0.0, maxval=2.0)
    xt = jnp.concatenate([q_xy, q_z], axis=-1)

    cfg = dict(k=8, closeness_weight=1.0, height_weight=0.5,
               boundary_weight=2.0)

    out = lidar_state_cost(xt, dataset, **cfg)
    out = jax.block_until_ready(out)

    ref = _reference(np.asarray(xt), np.asarray(dataset),
                     k=cfg["k"], cw=cfg["closeness_weight"],
                     hw=cfg["height_weight"], bw=cfg["boundary_weight"])

    assert out.shape == (B, S), out.shape
    assert np.allclose(np.asarray(out), ref, rtol=1e-2, atol=1e-2), (
        float(np.max(np.abs(np.asarray(out) - ref))))
    print("KERNEL_OK")
</pallas_src>

<mosaic_0001>
module attributes {stable_mosaic.version = 11 : i64} {
  func.func @_lidar_cost_kernel(%arg0: i32, %arg1: memref<3x128xf32, #tpu.memory_space<vmem>>, %arg2: memref<256x3xf32, #tpu.memory_space<vmem>>, %arg3: memref<256x1xf32, #tpu.memory_space<vmem>>, %arg4: memref<9x256xf32, #tpu.memory_space<vmem>>, %arg5: memref<1x128xf32, #tpu.memory_space<vmem>>) attributes {dimension_semantics = [#tpu.dimension_semantics<parallel>], iteration_bounds = array<i64: 2>, scalar_prefetch = 0 : i64, scratch_operands = 0 : i64, tpu.core_type = #tpu.core_type<tc>, window_params = [{transform_indices = @transform_0, window_bounds = array<i64: 3, 128>}, {pipeline_mode = #tpu.pipeline_mode<synchronous>, transform_indices = @transform_1, window_bounds = array<i64: 256, 3>}, {pipeline_mode = #tpu.pipeline_mode<synchronous>, transform_indices = @transform_2, window_bounds = array<i64: 256, 1>}, {pipeline_mode = #tpu.pipeline_mode<synchronous>, transform_indices = @transform_3, window_bounds = array<i64: 9, 256>}, {transform_indices = @transform_4, window_bounds = array<i64: 1, 128>}]} {
    %c0 = arith.constant 0 : index
    %c0_0 = arith.constant 0 : index
    %0 = vector.load %arg1[%c0, %c0_0] : memref<3x128xf32, #tpu.memory_space<vmem>>, vector<3x128xf32>
    %1 = vector.extract_strided_slice %0 {offsets = [0, 0], sizes = [1, 128], strides = [1, 1]} : vector<3x128xf32> to vector<1x128xf32>
    %2 = vector.extract_strided_slice %0 {offsets = [1, 0], sizes = [1, 128], strides = [1, 1]} : vector<3x128xf32> to vector<1x128xf32>
    %3 = vector.extract_strided_slice %0 {offsets = [2, 0], sizes = [1, 128], strides = [1, 1]} : vector<3x128xf32> to vector<1x128xf32>
    %c0_1 = arith.constant 0 : index
    %c0_2 = arith.constant 0 : index
    %4 = vector.load %arg3[%c0_1, %c0_2] : memref<256x1xf32, #tpu.memory_space<vmem>>, vector<256x1xf32>
    %c0_3 = arith.constant 0 : index
    %c0_4 = arith.constant 0 : index
    %5 = vector.load %arg2[%c0_3, %c0_4] : memref<256x3xf32, #tpu.memory_space<vmem>>, vector<256x3xf32>
    %cst = arith.constant dense<0.000000e+00> : vector<256x128xf32>
    %6 = tpu.matmul %5, %0, %cst {dimension_numbers = #tpu.dot_dimension_numbers<[1], [0], [0], [1], [0, 0, 1, 1], [], []>} : vector<256x3xf32>, vector<3x128xf32>, vector<256x128xf32> -> vector<256x128xf32>
    %cst_5 = arith.constant 2.000000e+00 : f32
    %7 = vector.broadcast %cst_5 : f32 to vector<256x128xf32>
    %8 = arith.mulf %7, %6 : vector<256x128xf32>
    %9 = vector.broadcast %4 : vector<256x1xf32> to vector<256x128xf32>
    %10 = arith.subf %9, %8 : vector<256x128xf32>
    %cst_6 = arith.constant dense<0x7F800000> : vector<128xf32>
    %11 = vector.multi_reduction <minimumf>, %10, %cst_6 [0] : vector<256x128xf32> to vector<128xf32>
    %12 = vector.shape_cast %11 : vector<128xf32> to vector<1x128xf32>
    %13 = vector.broadcast %12 : vector<1x128xf32> to vector<256x128xf32>
    %14 = arith.cmpf ole, %10, %13 : vector<256x128xf32>
    %cst_7 = arith.constant 3.000000e+38 : f32
    %15 = vector.broadcast %cst_7 : f32 to vector<256x128xf32>
    %16 = arith.select %14, %15, %10 : vector<256x128xi1>, vector<256x128xf32>
    %cst_8 = arith.constant dense<0x7F800000> : vector<128xf32>
    %17 = vector.multi_reduction <minimumf>, %16, %cst_8 [0] : vector<256x128xf32> to vector<128xf32>
    %18 = vector.shape_cast %17 : vector<128xf32> to vector<1x128xf32>
    %19 = vector.broadcast %18 : vector<1x128xf32> to vector<256x128xf32>
    %20 = arith.cmpf ole, %16, %19 : vector<256x128xf32>
    %cst_9 = arith.constant 3.000000e+38 : f32
    %21 = vector.broadcast %cst_9 : f32 to vector<256x128xf32>
    %22 = arith.select %20, %21, %16 : vector<256x128xi1>, vector<256x128xf32>
    %cst_10 = arith.constant dense<0x7F800000> : vector<128xf32>
    %23 = vector.multi_reduction <minimumf>, %22, %cst_10 [0] : vector<256x128xf32> to vector<128xf32>
    %24 = vector.shape_cast %23 : vector<128xf32> to vector<1x128xf32>
    %25 = vector.broadcast %24 : vector<1x128xf32> to vector<256x128xf32>
    %26 = arith.cmpf ole, %22, %25 : vector<256x128xf32>
    %cst_11 = arith.constant 3.000000e+38 : f32
    %27 = vector.broadcast %cst_11 : f32 to vector<256x128xf32>
    %28 = arith.select %26, %27, %22 : vector<256x128xi1>, vector<256x128xf32>
    %cst_12 = arith.constant dense<0x7F800000> : vector<128xf32>
    %29 = vector.multi_reduction <minimumf>, %28, %cst_12 [0] : vector<256x128xf32> to vector<128xf32>
    %30 = vector.shape_cast %29 : vector<128xf32> to vector<1x128xf32>
    %31 = vector.broadcast %30 : vector<1x128xf32> to vector<256x128xf32>
    %32 = arith.cmpf ole, %28, %31 : vector<256x128xf32>
    %cst_13 = arith.constant 3.000000e+38 : f32
    %33 = vector.broadcast %cst_13 : f32 to vector<256x128xf32>
    %34 = arith.select %32, %33, %28 : vector<256x128xi1>, vector<256x128xf32>
    %cst_14 = arith.constant dense<0x7F800000> : vector<128xf32>
    %35 = vector.multi_reduction <minimumf>, %34, %cst_14 [0] : vector<256x128xf32> to vector<128xf32>
    %36 = vector.shape_cast %35 : vector<128xf32> to vector<1x128xf32>
    %37 = vector.broadcast %36 : vector<1x128xf32> to vector<256x128xf32>
    %38 = arith.cmpf ole, %34, %37 : vector<256x128xf32>
    %cst_15 = arith.constant 3.000000e+38 : f32
    %39 = vector.broadcast %cst_15 : f32 to vector<256x128xf32>
    %40 = arith.select %38, %39, %34 : vector<256x128xi1>, vector<256x128xf32>
    %cst_16 = arith.constant dense<0x7F800000> : vector<128xf32>
    %41 = vector.multi_reduction <minimumf>, %40, %cst_16 [0] : vector<256x128xf32> to vector<128xf32>
    %42 = vector.shape_cast %41 : vector<128xf32> to vector<1x128xf32>
    %43 = vector.broadcast %42 : vector<1x128xf32> to vector<256x128xf32>
    %44 = arith.cmpf ole, %40, %43 : vector<256x128xf32>
    %cst_17 = arith.constant 3.000000e+38 : f32
    %45 = vector.broadcast %cst_17 : f32 to vector<256x128xf32>
    %46 = arith.select %44, %45, %40 : vector<256x128xi1>, vector<256x128xf32>
    %cst_18 = arith.constant dense<0x7F800000> : vector<128xf32>
    %47 = vector.multi_reduction <minimumf>, %46, %cst_18 [0] : vector<256x128xf32> to vector<128xf32>
    %48 = vector.shape_cast %47 : vector<128xf32> to vector<1x128xf32>
    %49 = vector.broadcast %48 : vector<1x128xf32> to vector<256x128xf32>
    %50 = arith.cmpf ole, %46, %49 : vector<256x128xf32>
    %cst_19 = arith.constant 3.000000e+38 : f32
    %51 = vector.broadcast %cst_19 : f32 to vector<256x128xf32>
    %52 = arith.select %50, %51, %46 : vector<256x128xi1>, vector<256x128xf32>
    %cst_20 = arith.constant dense<0x7F800000> : vector<128xf32>
    %53 = vector.multi_reduction <minimumf>, %52, %cst_20 [0] : vector<256x128xf32> to vector<128xf32>
    %54 = vector.shape_cast %53 : vector<128xf32> to vector<1x128xf32>
    %55 = vector.broadcast %54 : vector<1x128xf32> to vector<256x128xf32>
    %56 = arith.cmpf ole, %10, %55 : vector<256x128xf32>
    %57 = arith.extui %56 : vector<256x128xi1> to vector<256x128xi32>
    %58 = arith.sitofp %57 : vector<256x128xi32> to vector<256x128xf32>
    %c0_21 = arith.constant 0 : index
    %c0_22 = arith.constant 0 : index
    %59 = vector.load %arg4[%c0_21, %c0_22] : memref<9x256xf32, #tpu.memory_space<vmem>>, vector<9x256xf32>
    %cst_23 = arith.constant dense<0.000000e+00> : vector<9x128xf32>
    %60 = tpu.matmul %59, %58, %cst_23 {dimension_numbers = #tpu.dot_dimension_numbers<[1], [0], [0], [1], [0, 0, 1, 1], [], []>} : vector<9x256xf32>, vector<256x128xf32>, vector<9x128xf32> -> vector<9x128xf32>
    %61 = vector.extract_strided_slice %60 {offsets = [0, 0], sizes = [1, 128], strides = [1, 1]} : vector<9x128xf32> to vector<1x128xf32>
    %62 = vector.extract_strided_slice %60 {offsets = [1, 0], sizes = [1, 128], strides = [1, 1]} : vector<9x128xf32> to vector<1x128xf32>
    %63 = vector.extract_strided_slice %60 {offsets = [2, 0], sizes = [1, 128], strides = [1, 1]} : vector<9x128xf32> to vector<1x128xf32>
    %64 = vector.extract_strided_slice %60 {offsets = [3, 0], sizes = [1, 128], strides = [1, 1]} : vector<9x128xf32> to vector<1x128xf32>
    %65 = vector.extract_strided_slice %60 {offsets = [4, 0], sizes = [1, 128], strides = [1, 1]} : vector<9x128xf32> to vector<1x128xf32>
    %66 = vector.extract_strided_slice %60 {offsets = [5, 0], sizes = [1, 128], strides = [1, 1]} : vector<9x128xf32> to vector<1x128xf32>
    %67 = vector.extract_strided_slice %60 {offsets = [6, 0], sizes = [1, 128], strides = [1, 1]} : vector<9x128xf32> to vector<1x128xf32>
    %68 = vector.extract_strided_slice %60 {offsets = [7, 0], sizes = [1, 128], strides = [1, 1]} : vector<9x128xf32> to vector<1x128xf32>
    %69 = vector.extract_strided_slice %60 {offsets = [8, 0], sizes = [1, 128], strides = [1, 1]} : vector<9x128xf32> to vector<1x128xf32>
    %70 = arith.mulf %64, %66 : vector<1x128xf32>
    %71 = arith.mulf %65, %65 : vector<1x128xf32>
    %72 = arith.subf %70, %71 : vector<1x128xf32>
    %73 = arith.mulf %61, %72 : vector<1x128xf32>
    %74 = arith.mulf %62, %66 : vector<1x128xf32>
    %75 = arith.mulf %65, %63 : vector<1x128xf32>
    %76 = arith.subf %74, %75 : vector<1x128xf32>
    %77 = arith.mulf %62, %76 : vector<1x128xf32>
    %78 = arith.subf %73, %77 : vector<1x128xf32>
    %79 = arith.mulf %62, %65 : vector<1x128xf32>
    %80 = arith.mulf %64, %63 : vector<1x128xf32>
    %81 = arith.subf %79, %80 : vector<1x128xf32>
    %82 = arith.mulf %63, %81 : vector<1x128xf32>
    %83 = arith.addf %78, %82 : vector<1x128xf32>
    %84 = arith.mulf %64, %66 : vector<1x128xf32>
    %85 = arith.mulf %65, %65 : vector<1x128xf32>
    %86 = arith.subf %84, %85 : vector<1x128xf32>
    %87 = arith.mulf %67, %86 : vector<1x128xf32>
    %88 = arith.mulf %68, %66 : vector<1x128xf32>
    %89 = arith.mulf %65, %69 : vector<1x128xf32>
    %90 = arith.subf %88, %89 : vector<1x128xf32>
    %91 = arith.mulf %62, %90 : vector<1x128xf32>
    %92 = arith.subf %87, %91 : vector<1x128xf32>
    %93 = arith.mulf %68, %65 : vector<1x128xf32>
    %94 = arith.mulf %64, %69 : vector<1x128xf32>
    %95 = arith.subf %93, %94 : vector<1x128xf32>
    %96 = arith.mulf %63, %95 : vector<1x128xf32>
    %97 = arith.addf %92, %96 : vector<1x128xf32>
    %98 = arith.mulf %68, %66 : vector<1x128xf32>
    %99 = arith.mulf %65, %69 : vector<1x128xf32>
    %100 = arith.subf %98, %99 : vector<1x128xf32>
    %101 = arith.mulf %61, %100 : vector<1x128xf32>
    %102 = arith.mulf %62, %66 : vector<1x128xf32>
    %103 = arith.mulf %65, %63 : vector<1x128xf32>
    %104 = arith.subf %102, %103 : vector<1x128xf32>
    %105 = arith.mulf %67, %104 : vector<1x128xf32>
    %106 = arith.subf %101, %105 : vector<1x128xf32>
    %107 = arith.mulf %62, %69 : vector<1x128xf32>
    %108 = arith.mulf %68, %63 : vector<1x128xf32>
    %109 = arith.subf %107, %108 : vector<1x128xf32>
    %110 = arith.mulf %63, %109 : vector<1x128xf32>
    %111 = arith.addf %106, %110 : vector<1x128xf32>
    %112 = arith.mulf %64, %69 : vector<1x128xf32>
    %113 = arith.mulf %68, %65 : vector<1x128xf32>
    %114 = arith.subf %112, %113 : vector<1x128xf32>
    %115 = arith.mulf %61, %114 : vector<1x128xf32>
    %116 = arith.mulf %62, %69 : vector<1x128xf32>
    %117 = arith.mulf %68, %63 : vector<1x128xf32>
    %118 = arith.subf %116, %117 : vector<1x128xf32>
    %119 = arith.mulf %62, %118 : vector<1x128xf32>
    %120 = arith.subf %115, %119 : vector<1x128xf32>
    %121 = arith.mulf %62, %65 : vector<1x128xf32>
    %122 = arith.mulf %64, %63 : vector<1x128xf32>
    %123 = arith.subf %121, %122 : vector<1x128xf32>
    %124 = arith.mulf %67, %123 : vector<1x128xf32>
    %125 = arith.addf %120, %124 : vector<1x128xf32>
    %126 = tpu.reciprocal %83 {approx = true} : vector<1x128xf32> -> vector<1x128xf32>
    %127 = arith.mulf %97, %126 : vector<1x128xf32>
    %128 = arith.mulf %111, %126 : vector<1x128xf32>
    %129 = arith.mulf %125, %126 : vector<1x128xf32>
    %130 = arith.mulf %127, %1 : vector<1x128xf32>
    %131 = arith.mulf %128, %2 : vector<1x128xf32>
    %132 = arith.addf %130, %131 : vector<1x128xf32>
    %133 = arith.subf %132, %3 : vector<1x128xf32>
    %134 = arith.mulf %127, %127 : vector<1x128xf32>
    %135 = arith.mulf %128, %128 : vector<1x128xf32>
    %136 = arith.addf %134, %135 : vector<1x128xf32>
    %cst_24 = arith.constant 1.000000e+00 : f32
    %137 = vector.broadcast %cst_24 : f32 to vector<1x128xf32>
    %138 = arith.addf %136, %137 : vector<1x128xf32>
    %139 = arith.addf %133, %129 : vector<1x128xf32>
    %140 = tpu.reciprocal %138 {approx = true} : vector<1x128xf32> -> vector<1x128xf32>
    %141 = arith.mulf %139, %140 : vector<1x128xf32>
    %142 = arith.mulf %141, %141 : vector<1x128xf32>
    %143 = arith.mulf %142, %138 : vector<1x128xf32>
    %144 = arith.addf %3, %141 : vector<1x128xf32>
    %145 = math.exp %144 : vector<1x128xf32>
    %cst_25 = arith.constant 5.000000e+00 : f32
    %146 = vector.broadcast %cst_25 : f32 to vector<1x128xf32>
    %147 = arith.subf %1, %146 : vector<1x128xf32>
    %cst_26 = arith.constant 1.000000e-01 : f32
    %148 = vector.broadcast %cst_26 : f32 to vector<1x128xf32>
    %149 = arith.divf %147, %148 : vector<1x128xf32>
    %150 = arith.negf %149 : vector<1x128xf32>
    %151 = math.exp %150 : vector<1x128xf32>
    %cst_27 = arith.constant 1.000000e+00 : f32
    %152 = vector.broadcast %cst_27 : f32 to vector<1x128xf32>
    %153 = arith.addf %152, %151 : vector<1x128xf32>
    %154 = arith.divf %152, %153 : vector<1x128xf32>
    %cst_28 = arith.constant 1.000000e+00 : f32
    %155 = vector.broadcast %cst_28 : f32 to vector<1x128xf32>
    %156 = arith.addf %154, %155 : vector<1x128xf32>
    %cst_29 = arith.constant 5.000000e+00 : f32
    %157 = vector.broadcast %cst_29 : f32 to vector<1x128xf32>
    %158 = arith.addf %1, %157 : vector<1x128xf32>
    %cst_30 = arith.constant 1.000000e-01 : f32
    %159 = vector.broadcast %cst_30 : f32 to vector<1x128xf32>
    %160 = arith.divf %158, %159 : vector<1x128xf32>
    %161 = arith.negf %160 : vector<1x128xf32>
    %162 = math.exp %161 : vector<1x128xf32>
    %cst_31 = arith.constant 1.000000e+00 : f32
    %163 = vector.broadcast %cst_31 : f32 to vector<1x128xf32>
    %164 = arith.addf %163, %162 : vector<1x128xf32>
    %165 = arith.divf %163, %164 : vector<1x128xf32>
    %166 = arith.subf %156, %165 : vector<1x128xf32>
    %cst_32 = arith.constant 5.000000e+00 : f32
    %167 = vector.broadcast %cst_32 : f32 to vector<1x128xf32>
    %168 = arith.subf %2, %167 : vector<1x128xf32>
    %cst_33 = arith.constant 1.000000e-01 : f32
    %169 = vector.broadcast %cst_33 : f32 to vector<1x128xf32>
    %170 = arith.divf %168, %169 : vector<1x128xf32>
    %171 = arith.negf %170 : vector<1x128xf32>
    %172 = math.exp %171 : vector<1x128xf32>
    %cst_34 = arith.constant 1.000000e+00 : f32
    %173 = vector.broadcast %cst_34 : f32 to vector<1x128xf32>
    %174 = arith.addf %173, %172 : vector<1x128xf32>
    %175 = arith.divf %173, %174 : vector<1x128xf32>
    %cst_35 = arith.constant 1.000000e+00 : f32
    %176 = vector.broadcast %cst_35 : f32 to vector<1x128xf32>
    %177 = arith.addf %175, %176 : vector<1x128xf32>
    %cst_36 = arith.constant 5.000000e+00 : f32
    %178 = vector.broadcast %cst_36 : f32 to vector<1x128xf32>
    %179 = arith.addf %2, %178 : vector<1x128xf32>
    %cst_37 = arith.constant 1.000000e-01 : f32
    %180 = vector.broadcast %cst_37 : f32 to vector<1x128xf32>
    %181 = arith.divf %179, %180 : vector<1x128xf32>
    %182 = arith.negf %181 : vector<1x128xf32>
    %183 = math.exp %182 : vector<1x128xf32>
    %cst_38 = arith.constant 1.000000e+00 : f32
    %184 = vector.broadcast %cst_38 : f32 to vector<1x128xf32>
    %185 = arith.addf %184, %183 : vector<1x128xf32>
    %186 = arith.divf %184, %185 : vector<1x128xf32>
    %187 = arith.subf %177, %186 : vector<1x128xf32>
    %188 = arith.addf %166, %187 : vector<1x128xf32>
    %cst_39 = arith.constant 1.000000e+00 : f32
    %189 = vector.broadcast %cst_39 : f32 to vector<1x128xf32>
    %190 = arith.mulf %189, %143 : vector<1x128xf32>
    %cst_40 = arith.constant 5.000000e-01 : f32
    %191 = vector.broadcast %cst_40 : f32 to vector<1x128xf32>
    %192 = arith.mulf %191, %145 : vector<1x128xf32>
    %193 = arith.addf %190, %192 : vector<1x128xf32>
    %cst_41 = arith.constant 2.000000e+00 : f32
    %194 = vector.broadcast %cst_41 : f32 to vector<1x128xf32>
    %195 = arith.mulf %194, %188 : vector<1x128xf32>
    %196 = arith.addf %193, %195 : vector<1x128xf32>
    %c0_42 = arith.constant 0 : index
    %c0_43 = arith.constant 0 : index
    %197 = vector.load %arg5[%c0_42, %c0_43] : memref<1x128xf32, #tpu.memory_space<vmem>>, vector<1x128xf32>
    tpu.vector_store %arg5[%c0_42, %c0_43], %196 {strides = array<i32>} : memref<1x128xf32, #tpu.memory_space<vmem>>, vector<1x128xf32>,
    return
  }
  func.func @transform_0(%arg0: i32) -> (i32, i32) {
    %c0_i32 = arith.constant 0 : i32
    %c0_i32_0 = arith.constant 0 : i32
    return %c0_i32, %arg0 : i32, i32
  }
  func.func @transform_1(%arg0: i32) -> (i32, i32) {
    %c0_i32 = arith.constant 0 : i32
    %c0_i32_0 = arith.constant 0 : i32
    %c0_i32_1 = arith.constant 0 : i32
    return %c0_i32, %c0_i32_0 : i32, i32
  }
  func.func @transform_2(%arg0: i32) -> (i32, i32) {
    %c0_i32 = arith.constant 0 : i32
    %c0_i32_0 = arith.constant 0 : i32
    %c0_i32_1 = arith.constant 0 : i32
    return %c0_i32, %c0_i32_0 : i32, i32
  }
  func.func @transform_3(%arg0: i32) -> (i32, i32) {
    %c0_i32 = arith.constant 0 : i32
    %c0_i32_0 = arith.constant 0 : i32
    %c0_i32_1 = arith.constant 0 : i32
    return %c0_i32, %c0_i32_0 : i32, i32
  }
  func.func @transform_4(%arg0: i32) -> (i32, i32) {
    %c0_i32 = arith.constant 0 : i32
    %c0_i32_0 = arith.constant 0 : i32
    return %c0_i32, %arg0 : i32, i32
  }
}

</mosaic_0001>

<llo_original>
// kernel: tpu_custom_call.1
$region0: #{tpu_custom_call.1}
  #allocation0 [shape = 'u32[]', space=smem, size = 0x4, offset = 0x4, fixed_abs, tag = 'smem constant byte address 0x4 - core index']
  #allocation1 [shape = 'u32[144,128]{1,0:T(1,128)}', space=vmem, size = 0x12000, scoped, tag = 'internal scratch']
  %s0 = inlined_call_operand.vmem [shape: f32[3,256], index: 0, kind: input, shape index: {}]
  %s1 = inlined_call_operand.vmem [shape: f32[256,3], index: 1, kind: input, shape index: {}]
  %s2 = inlined_call_operand.vmem [shape: f32[256,1], index: 2, kind: input, shape index: {}]
  %s3 = inlined_call_operand.vmem [shape: f32[9,256], index: 3, kind: input, shape index: {}]
  %s4 = inlined_call_operand.hbm [shape: f32[1,256], index: 4, kind: output, shape index: {}]
  %s5 = sld [smem:[#allocation0]]
  $region49: #{tpu_custom_call.1} parent=0
    _
  %s7 = ssub.s32 1, %s5
  %s8 = scalar_select 0, %s7, %s5
  $region1: #{tpu_custom_call.1} parent=0
    #allocation2 [shape = 'u8[1024]{0}', space=vmem, size = 0x400, scoped, tag = 'output window, operand 0']
    #allocation3 [shape = 's32[2]{0}', space=sflag, size = 0x8, scoped, tag = 'scoped memory for tpu_custom_call.1']
    %9 = vsyncpa [#allocation3], 0
    %s10 = scalar_lea.sflag [#allocation3], 1
    %11 = vsyncpa %s10, 0
    loop: start=0, step=1, limit=4
    $region2: #{tpu_custom_call.1} parent=1 // loop_pre_header
      _
    $region3: #{tpu_custom_call.1} parent=1 // loop_header
      %s13 = sphi 0, %s17
      %p14 = scmp.ge.s32.totalorder %s13, 4
      %s23 = sphi 0, %s25
      %s26 = sphi 0, %s23
      %s27 = sphi 0, %s26
      %s43 = sphi 0, %s27
      %s47 = sphi 0, %s47
      %s49 = sphi 0, %s47
      %s50 = sphi 0, %s49
      %s64 = sphi 0, %s50
      %s68 = sphi 0, %s68
      %s70 = sphi 0, %s68
      %s71 = sphi 0, %s70
      %s85 = sphi 0, %s71
      %s89 = sphi 0, %s89
      %s91 = sphi 0, %s89
      %s92 = sphi 0, %s91
      %s106 = sphi 0, %s92
      %s112 = sphi 0, %s114
      %s115 = sphi 0, %s112
      %s116 = sphi 0, %s115
      %s132 = sphi 0, %s116
    $region4: #{tpu_custom_call.1} parent=1 // loop_header_branch
      %16 = sbr.rel (%p14) target = $region8
    $region5: #{tpu_custom_call.1} parent=1 // loop_body
      %s18 = ssub.s32 %s13, 1
      %s19 = ssub.s32 %s13, 2
      %s20 = sadd.s32 %s13, 1
      %s21 = ssub.s32 %s13, %s20
      %p22 = scmp.eq.s32.totalorder %s21, 0
      %s24 = sadd.s32 %s23, 1
      %s25 = scalar_select %p22, %s23, %s24
      %p28 = pneg %p22
      %p29 = scmp.eq.s32.totalorder %s13, 1
      %p30 = por %p28, %p29
      %p31 = scmp.ne.s32.totalorder %s23, %s26
      %p32 = scmp.eq.s32.totalorder %s13, 0
      %p33 = por %p31, %p32
      %p34 = scmp.ne.s32.totalorder %s23, %s26
      %p35 = scmp.eq.s32.totalorder %s18, 1
      %p36 = por %p34, %p35
      %p37 = scmp.ne.s32.totalorder %s26, %s27
      %p38 = scmp.eq.s32.totalorder %s18, 0
      %p39 = por %p37, %p38
      %p40 = scmp.ne.s32.totalorder %s26, %s27
      %p41 = scmp.eq.s32.totalorder %s19, 1
      %p42 = por %p40, %p41
      %p44 = scmp.ne.s32.totalorder %s27, %s43
      %p45 = scmp.eq.s32.totalorder %s19, 0
      %p46 = por %p44, %p45
      %s48 = sadd.s32 %s47, 1
      %p51 = scmp.eq.s32.totalorder %s13, 1
      %p52 = scmp.ne.s32.totalorder %s47, %s49
      %p53 = scmp.eq.s32.totalorder %s13, 0
      %p54 = por %p52, %p53
      %p55 = scmp.ne.s32.totalorder %s47, %s49
      %p56 = scmp.eq.s32.totalorder %s18, 1
      %p57 = por %p55, %p56
      %p58 = scmp.ne.s32.totalorder %s49, %s50
      %p59 = scmp.eq.s32.totalorder %s18, 0
      %p60 = por %p58, %p59
      %p61 = scmp.ne.s32.totalorder %s49, %s50
      %p62 = scmp.eq.s32.totalorder %s19, 1
      %p63 = por %p61, %p62
      %p65 = scmp.ne.s32.totalorder %s50, %s64
      %p66 = scmp.eq.s32.totalorder %s19, 0
      %p67 = por %p65, %p66
      %s69 = sadd.s32 %s68, 1
      %p72 = scmp.eq.s32.totalorder %s13, 1
      %p73 = scmp.ne.s32.totalorder %s68, %s70
      %p74 = scmp.eq.s32.totalorder %s13, 0
      %p75 = por %p73, %p74
      %p76 = scmp.ne.s32.totalorder %s68, %s70
      %p77 = scmp.eq.s32.totalorder %s18, 1
      %p78 = por %p76, %p77
      %p79 = scmp.ne.s32.totalorder %s70, %s71
      %p80 = scmp.eq.s32.totalorder %s18, 0
      %p81 = por %p79, %p80
      %p82 = scmp.ne.s32.totalorder %s70, %s71
      %p83 = scmp.eq.s32.totalorder %s19, 1
      %p84 = por %p82, %p83
      %p86 = scmp.ne.s32.totalorder %s71, %s85
      %p87 = scmp.eq.s32.totalorder %s19, 0
      %p88 = por %p86, %p87
      %s90 = sadd.s32 %s89, 1
      %p93 = scmp.eq.s32.totalorder %s13, 1
      %p94 = scmp.ne.s32.totalorder %s89, %s91
      %p95 = scmp.eq.s32.totalorder %s13, 0
      %p96 = por %p94, %p95
      %p97 = scmp.ne.s32.totalorder %s89, %s91
      %p98 = scmp.eq.s32.totalorder %s18, 1
      %p99 = por %p97, %p98
      %p100 = scmp.ne.s32.totalorder %s91, %s92
      %p101 = scmp.eq.s32.totalorder %s18, 0
      %p102 = por %p100, %p101
      %p103 = scmp.ne.s32.totalorder %s91, %s92
      %p104 = scmp.eq.s32.totalorder %s19, 1
      %p105 = por %p103, %p104
      %p107 = scmp.ne.s32.totalorder %s92, %s106
      %p108 = scmp.eq.s32.totalorder %s19, 0
      %p109 = por %p107, %p108
      %s110 = ssub.s32 %s13, %s20
      %p111 = scmp.eq.s32.totalorder %s110, 0
      %s113 = sadd.s32 %s112, 1
      %s114 = scalar_select %p111, %s112, %s113
      %p117 = pneg %p111
      %p118 = scmp.eq.s32.totalorder %s13, 1
      %p119 = por %p117, %p118
      %p120 = scmp.ne.s32.totalorder %s112, %s115
      %p121 = scmp.eq.s32.totalorder %s13, 0
      %p122 = por %p120, %p121
      %p123 = scmp.ne.s32.totalorder %s112, %s115
      %p124 = scmp.eq.s32.totalorder %s18, 1
      %p125 = por %p123, %p124
      %p126 = scmp.ne.s32.totalorder %s115, %s116
      %p127 = scmp.eq.s32.totalorder %s18, 0
      %p128 = por %p126, %p127
      %p129 = scmp.ne.s32.totalorder %s115, %s116
      %p130 = scmp.eq.s32.totalorder %s19, 1
      %p131 = por %p129, %p130
      %p133 = scmp.ne.s32.totalorder %s116, %s132
      %p134 = scmp.eq.s32.totalorder %s19, 0
      %p135 = por %p133, %p134
      %p136 = scmp.le.s32.totalorder 1, %s13
      %p137 = scmp.lt.s32.totalorder %s13, 3
      %p138 = pnand %p136, %p137
      %p139 = pneg %p138
      // Predicated region
      $region9: #{tpu_custom_call.1} parent=5 // pred_check
        _
      $region10: #{tpu_custom_call.1} parent=5 // pred_check_branch
        %141 = sbr.rel (%p138) target = $region12
      $region11: #{tpu_custom_call.1} parent=5 // pred_region
        %s142 = ssub.s32 %s13, 1
        // Predicated region
        $region13: #{tpu_custom_call.1} parent=11 // pred_check
          %p143 = pneg %p60
        $region14: #{tpu_custom_call.1} parent=11 // pred_check_branch
          %145 = sbr.rel (%p143) target = $region16
        $region15: #{tpu_custom_call.1} parent=11 // pred_region
          _
        $region16: #{tpu_custom_call.1} parent=11 // pred_fallthru
          _
        // Predicated region
        $region17: #{tpu_custom_call.1} parent=11 // pred_check
          %p146 = pneg %p81
        $region18: #{tpu_custom_call.1} parent=11 // pred_check_branch
          %148 = sbr.rel (%p146) target = $region20
        $region19: #{tpu_custom_call.1} parent=11 // pred_region
          _
        $region20: #{tpu_custom_call.1} parent=11 // pred_fallthru
          _
        // Predicated region
        $region21: #{tpu_custom_call.1} parent=11 // pred_check
          %p149 = pneg %p102
        $region22: #{tpu_custom_call.1} parent=11 // pred_check_branch
          %151 = sbr.rel (%p149) target = $region24
        $region23: #{tpu_custom_call.1} parent=11 // pred_region
          _
        $region24: #{tpu_custom_call.1} parent=11 // pred_fallthru
          _
      $region12: #{tpu_custom_call.1} parent=5 // pred_fallthru
        _
      %p152 = scmp.lt.s32.totalorder %s13, 2
      // Predicated region
      $region25: #{tpu_custom_call.1} parent=5 // pred_check
        %p153 = pneg %p152
      $region26: #{tpu_custom_call.1} parent=5 // pred_check_branch
        %155 = sbr.rel (%p153) target = $region28
      $region27: #{tpu_custom_call.1} parent=5 // pred_region
        // Predicated region
        $region29: #{tpu_custom_call.1} parent=27 // pred_check
          %p156 = pneg %p33
        $region30: #{tpu_custom_call.1} parent=27 // pred_check_branch
          %158 = sbr.rel (%p156) target = $region32
        $region31: #{tpu_custom_call.1} parent=27 // pred_region
          %p159 = scmp.lt.s32.totalorder %s13, 1
          %s160 = scalar_select %p159, %s13, 1
          %s161 = smul.addr %s160, 4
          %s162 = scalar_lea.vmem %s0, %s161
        $region32: #{tpu_custom_call.1} parent=27 // pred_fallthru
          _
      $region28: #{tpu_custom_call.1} parent=5 // pred_fallthru
        _
      %p163 = scmp.le.s32.totalorder 1, %s13
      %p164 = scmp.lt.s32.totalorder %s13, 3
      %p165 = pnand %p163, %p164
      %p166 = pneg %p165
      // Predicated region
      $region33: #{tpu_custom_call.1} parent=5 // pred_check
        _
      $region34: #{tpu_custom_call.1} parent=5 // pred_check_branch
        %168 = sbr.rel (%p165) target = $region36
      $region35: #{tpu_custom_call.1} parent=5 // pred_region
        %s169 = ssub.s32 %s13, 1
        %p170 = scmp.lt.s32.totalorder %s18, 1
        %s171 = scalar_select %p170, %s18, 1
        %s172 = smul.addr %s171, 4
        %s173 = scalar_lea.vmem %s0, %s172
        %p174 = pneg %p39
        %p175 = pneg %p36
        %p176 = pneg %p60
        %p177 = pneg %p57
        %p178 = pneg %p81
        %p179 = pneg %p78
        %p180 = pneg %p102
        %p181 = pneg %p99
        %p182 = pneg %p128
        %p183 = pneg %p125
        %s184 = sand.u32 %s115, 1
        %s185 = scalar_lea.sflag [#allocation3], %s184
        %s186 = sand.u32 %s115, 1
        %s187 = scalar_lea.vmem [#allocation2], %s186
        %p188 = scmp.lt.s32.totalorder %s18, 1
        %s189 = scalar_select %p188, %s18, 1
        %s190 = smul.addr %s189, 4
        %s191 = scalar_lea.vmem %s0, %s190
        %v192 = vld [vmem:[%s191] sm:$0x7]
        %v193 = vld [vmem:[%s2] sm:$0xff]
        %v194 = vld [vmem:[%s2 + $0x8] sm:$0xff]
        %v195 = vld [vmem:[%s2 + $0x10] sm:$0xff]
        %v196 = vld [vmem:[%s2 + $0x18] sm:$0xff]
        %v197 = vld [vmem:[%s2 + $0x20] sm:$0xff]
        %v198 = vld [vmem:[%s2 + $0x28] sm:$0xff]
        %v199 = vld [vmem:[%s2 + $0x30] sm:$0xff]
        %v200 = vld [vmem:[%s2 + $0x38] sm:$0xff]
        %v201 = vld [vmem:[%s2 + $0x40] sm:$0xff]
        %v202 = vld [vmem:[%s2 + $0x48] sm:$0xff]
        %v203 = vld [vmem:[%s2 + $0x50] sm:$0xff]
        %v204 = vld [vmem:[%s2 + $0x58] sm:$0xff]
        %v205 = vld [vmem:[%s2 + $0x60] sm:$0xff]
        %v206 = vld [vmem:[%s2 + $0x68] sm:$0xff]
        %v207 = vld [vmem:[%s2 + $0x70] sm:$0xff]
        %v208 = vld [vmem:[%s2 + $0x78] sm:$0xff]
        %v209 = vld [vmem:[%s2 + $0x80] sm:$0xff]
        %v210 = vld [vmem:[%s2 + $0x88] sm:$0xff]
        %v211 = vld [vmem:[%s2 + $0x90] sm:$0xff]
        %v212 = vld [vmem:[%s2 + $0x98] sm:$0xff]
        %v213 = vld [vmem:[%s2 + $0xa0] sm:$0xff]
        %v214 = vld [vmem:[%s2 + $0xa8] sm:$0xff]
        %v215 = vld [vmem:[%s2 + $0xb0] sm:$0xff]
        %v216 = vld [vmem:[%s2 + $0xb8] sm:$0xff]
        %v217 = vld [vmem:[%s2 + $0xc0] sm:$0xff]
        %v218 = vld [vmem:[%s2 + $0xc8] sm:$0xff]
        %v219 = vld [vmem:[%s2 + $0xd0] sm:$0xff]
        %v220 = vld [vmem:[%s2 + $0xd8] sm:$0xff]
        %v221 = vld [vmem:[%s2 + $0xe0] sm:$0xff]
        %v222 = vld [vmem:[%s2 + $0xe8] sm:$0xff]
        %v223 = vld [vmem:[%s2 + $0xf0] sm:$0xff]
        %v224 = vld [vmem:[%s2 + $0xf8] sm:$0xff]
        %v225 = vld [vmem:[%s1] sm:$0xff]
        %v226 = vld [vmem:[%s1 + $0x8] sm:$0xff]
        %v227 = vld [vmem:[%s1 + $0x10] sm:$0xff]
        %v228 = vld [vmem:[%s1 + $0x18] sm:$0xff]
        %v229 = vld [vmem:[%s1 + $0x20] sm:$0xff]
        %v230 = vld [vmem:[%s1 + $0x28] sm:$0xff]
        %v231 = vld [vmem:[%s1 + $0x30] sm:$0xff]
        %v232 = vld [vmem:[%s1 + $0x38] sm:$0xff]
        %v233 = vld [vmem:[%s1 + $0x40] sm:$0xff]
        %v234 = vld [vmem:[%s1 + $0x48] sm:$0xff]
        %v235 = vld [vmem:[%s1 + $0x50] sm:$0xff]
        %v236 = vld [vmem:[%s1 + $0x58] sm:$0xff]
        %v237 = vld [vmem:[%s1 + $0x60] sm:$0xff]
        %v238 = vld [vmem:[%s1 + $0x68] sm:$0xff]
        %v239 = vld [vmem:[%s1 + $0x70] sm:$0xff]
        %v240 = vld [vmem:[%s1 + $0x78] sm:$0xff]
        %v241 = vld [vmem:[%s1 + $0x80] sm:$0xff]
        %v242 = vld [vmem:[%s1 + $0x88] sm:$0xff]
        %v243 = vld [vmem:[%s1 + $0x90] sm:$0xff]
        %v244 = vld [vmem:[%s1 + $0x98] sm:$0xff]
        %v245 = vld [vmem:[%s1 + $0xa0] sm:$0xff]
        %v246 = vld [vmem:[%s1 + $0xa8] sm:$0xff]
        %v247 = vld [vmem:[%s1 + $0xb0] sm:$0xff]
        %v248 = vld [vmem:[%s1 + $0xb8] sm:$0xff]
        %v249 = vld [vmem:[%s1 + $0xc0] sm:$0xff]
        %v250 = vld [vmem:[%s1 + $0xc8] sm:$0xff]
        %v251 = vld [vmem:[%s1 + $0xd0] sm:$0xff]
        %v252 = vld [vmem:[%s1 + $0xd8] sm:$0xff]
        %v253 = vld [vmem:[%s1 + $0xe0] sm:$0xff]
        %v254 = vld [vmem:[%s1 + $0xe8] sm:$0xff]
        %v255 = vld [vmem:[%s1 + $0xf0] sm:$0xff]
        %v256 = vld [vmem:[%s1 + $0xf8] sm:$0xff]
        %vm257 = vcmask 23552
        %v259 = vsel %vm257, %v225, 0
        %v262 = vsel %vm257, %v226, 0
        %v265 = vsel %vm257, %v227, 0
        %v268 = vsel %vm257, %v228, 0
        %v271 = vsel %vm257, %v229, 0
        %v274 = vsel %vm257, %v230, 0
        %v277 = vsel %vm257, %v231, 0
        %v280 = vsel %vm257, %v232, 0
        %v283 = vsel %vm257, %v233, 0
        %v286 = vsel %vm257, %v234, 0
        %v289 = vsel %vm257, %v235, 0
        %v292 = vsel %vm257, %v236, 0
        %v295 = vsel %vm257, %v237, 0
        %v298 = vsel %vm257, %v238, 0
        %v301 = vsel %vm257, %v239, 0
        %v304 = vsel %vm257, %v240, 0
        %v307 = vsel %vm257, %v241, 0
        %v310 = vsel %vm257, %v242, 0
        %v313 = vsel %vm257, %v243, 0
        %v316 = vsel %vm257, %v244, 0
        %v319 = vsel %vm257, %v245, 0
        %v322 = vsel %vm257, %v246, 0
        %v325 = vsel %vm257, %v247, 0
        %v328 = vsel %vm257, %v248, 0
        %v331 = vsel %vm257, %v249, 0
        %v334 = vsel %vm257, %v250, 0
        %v337 = vsel %vm257, %v251, 0
        %v340 = vsel %vm257, %v252, 0
        %v343 = vsel %vm257, %v253, 0
        %v346 = vsel %vm257, %v254, 0
        %v349 = vsel %vm257, %v255, 0
        %v352 = vsel %vm257, %v256, 0
        %vm354 = vcmask 1042432
        %v356 = vsel %vm354, %v192, 0
        %358 = vmatprep.subr.mxu0 0.0
        %359 = vmatpush1.msra.mxu0 0.0
        %360 = vmatprep.subr.mxu0 0.0
        %361 = vmatpush1.msra.mxu0 0.0
        %362 = vmatprep.subr.mxu0 0.0
        %363 = vmatpush1.msra.mxu0 0.0
        %364 = vmatprep.subr.mxu0 0.0
        %365 = vmatpush1.msra.mxu0 0.0
        %366 = vmatprep.subr.mxu0 0.0
        %367 = vmatpush1.msra.mxu0 0.0
        %368 = vmatprep.subr.mxu0 0.0
        %369 = vmatpush1.msra.mxu0 0.0
        %370 = vmatprep.subr.mxu0 0.0
        %371 = vmatpush1.msra.mxu0 0.0
        %372 = vmatprep.subr.mxu0 0.0
        %373 = vmatpush1.msra.mxu0 0.0
        %374 = vmatprep.subr.mxu0 0.0
        %375 = vmatpush1.msra.mxu0 0.0
        %376 = vmatprep.subr.mxu0 0.0
        %377 = vmatpush1.msra.mxu0 0.0
        %378 = vmatprep.subr.mxu0 0.0
        %379 = vmatpush1.msra.mxu0 0.0
        %380 = vmatprep.subr.mxu0 0.0
        %381 = vmatpush1.msra.mxu0 0.0
        %382 = vmatprep.subr.mxu0 0.0
        %383 = vmatpush1.msra.mxu0 0.0
        %384 = vmatprep.subr.mxu0 0.0
        %385 = vmatpush1.msra.mxu0 0.0
        %386 = vmatprep.subr.mxu0 0.0
        %387 = vmatpush1.msra.mxu0 0.0
        %388 = vmatprep.subr.mxu0 0.0
        %389 = vmatpush1.msra.mxu0 %v356
        %390 = vmatprep.subr.mxu0 0.0
        %391 = vmatpush2.msra.mxu0 0.0
        %392 = vmatprep.subr.mxu0 0.0
        %393 = vmatpush2.msra.mxu0 0.0
        %394 = vmatprep.subr.mxu0 0.0
        %395 = vmatpush2.msra.mxu0 0.0
        %396 = vmatprep.subr.mxu0 0.0
        %397 = vmatpush2.msra.mxu0 0.0
        %398 = vmatprep.subr.mxu0 0.0
        %399 = vmatpush2.msra.mxu0 0.0
        %400 = vmatprep.subr.mxu0 0.0
        %401 = vmatpush2.msra.mxu0 0.0
        %402 = vmatprep.subr.mxu0 0.0
        %403 = vmatpush2.msra.mxu0 0.0
        %404 = vmatprep.subr.mxu0 0.0
        %405 = vmatpush2.msra.mxu0 0.0
        %406 = vmatprep.subr.mxu0 0.0
        %407 = vmatpush2.msra.mxu0 0.0
        %408 = vmatprep.subr.mxu0 0.0
        %409 = vmatpush2.msra.mxu0 0.0
        %410 = vmatprep.subr.mxu0 0.0
        %411 = vmatpush2.msra.mxu0 0.0
        %412 = vmatprep.subr.mxu0 0.0
        %413 = vmatpush2.msra.mxu0 0.0
        %414 = vmatprep.subr.mxu0 0.0
        %415 = vmatpush2.msra.mxu0 0.0
        %416 = vmatprep.subr.mxu0 0.0
        %417 = vmatpush2.msra.mxu0 0.0
        %418 = vmatprep.subr.mxu0 0.0
        %419 = vmatpush2.msra.mxu0 0.0
        %420 = vmatprep.subr.mxu0 0.0
        %421 = vmatpush2.msra.mxu0 0.0
        %422 = vmatprep.mubr.f32.mxu0 0.0
        %423 = vmatmul.mubr.f32.gmra.mxu0 %v259
        %v424 = vpop.f32.mrf.mxu0
        %v425 = vadd.f32 0.0, %v424
        %v426 = vpop.f32.mrf.mxu0
        %427 = vmatprep.mubr.f32.mxu0 0.0
        %428 = vmatmul.mubr.f32.gmra.mxu0 %v262
        %v429 = vpop.f32.mrf.mxu0
        %v430 = vadd.f32 0.0, %v429
        %v431 = vpop.f32.mrf.mxu0
        %432 = vmatprep.mubr.f32.mxu0 0.0
        %433 = vmatmul.mubr.f32.gmra.mxu0 %v265
        %v434 = vpop.f32.mrf.mxu0
        %v435 = vadd.f32 0.0, %v434
        %v436 = vpop.f32.mrf.mxu0
        %437 = vmatprep.mubr.f32.mxu0 0.0
        %438 = vmatmul.mubr.f32.gmra.mxu0 %v268
        %v439 = vpop.f32.mrf.mxu0
        %v440 = vadd.f32 0.0, %v439
        %v441 = vpop.f32.mrf.mxu0
        %442 = vmatprep.mubr.f32.mxu0 0.0
        %443 = vmatmul.mubr.f32.gmra.mxu0 %v271
        %v444 = vpop.f32.mrf.mxu0
        %v445 = vadd.f32 0.0, %v444
        %v446 = vpop.f32.mrf.mxu0
        %447 = vmatprep.mubr.f32.mxu0 0.0
        %448 = vmatmul.mubr.f32.gmra.mxu0 %v274
        %v449 = vpop.f32.mrf.mxu0
        %v450 = vadd.f32 0.0, %v449
        %v451 = vpop.f32.mrf.mxu0
        %452 = vmatprep.mubr.f32.mxu0 0.0
        %453 = vmatmul.mubr.f32.gmra.mxu0 %v277
        %v454 = vpop.f32.mrf.mxu0
        %v455 = vadd.f32 0.0, %v454
        %v456 = vpop.f32.mrf.mxu0
        %457 = vmatprep.mubr.f32.mxu0 0.0
        %458 = vmatmul.mubr.f32.gmra.mxu0 %v280
        %v459 = vpop.f32.mrf.mxu0
        %v460 = vadd.f32 0.0, %v459
        %v461 = vpop.f32.mrf.mxu0
        %462 = vmatprep.mubr.f32.mxu0 0.0
        %463 = vmatmul.mubr.f32.gmra.mxu0 %v283
        %v464 = vpop.f32.mrf.mxu0
        %v465 = vadd.f32 0.0, %v464
        %v466 = vpop.f32.mrf.mxu0
        %467 = vmatprep.mubr.f32.mxu0 0.0
        %468 = vmatmul.mubr.f32.gmra.mxu0 %v286
        %v469 = vpop.f32.mrf.mxu0
        %v470 = vadd.f32 0.0, %v469
        %v471 = vpop.f32.mrf.mxu0
        %472 = vmatprep.mubr.f32.mxu0 0.0
        %473 = vmatmul.mubr.f32.gmra.mxu0 %v289
        %v474 = vpop.f32.mrf.mxu0
        %v475 = vadd.f32 0.0, %v474
        %v476 = vpop.f32.mrf.mxu0
        %477 = vmatprep.mubr.f32.mxu0 0.0
        %478 = vmatmul.mubr.f32.gmra.mxu0 %v292
        %v479 = vpop.f32.mrf.mxu0
        %v480 = vadd.f32 0.0, %v479
        %v481 = vpop.f32.mrf.mxu0
        %482 = vmatprep.mubr.f32.mxu0 0.0
        %483 = vmatmul.mubr.f32.gmra.mxu0 %v295
        %v484 = vpop.f32.mrf.mxu0
        %v485 = vadd.f32 0.0, %v484
        %v486 = vpop.f32.mrf.mxu0
        %487 = vmatprep.mubr.f32.mxu0 0.0
        %488 = vmatmul.mubr.f32.gmra.mxu0 %v298
        %v489 = vpop.f32.mrf.mxu0
        %v490 = vadd.f32 0.0, %v489
        %v491 = vpop.f32.mrf.mxu0
        %492 = vmatprep.mubr.f32.mxu0 0.0
        %493 = vmatmul.mubr.f32.gmra.mxu0 %v301
        %v494 = vpop.f32.mrf.mxu0
        %v495 = vadd.f32 0.0, %v494
        %v496 = vpop.f32.mrf.mxu0
        %497 = vmatprep.mubr.f32.mxu0 0.0
        %498 = vmatmul.mubr.f32.gmra.mxu0 %v304
        %v499 = vpop.f32.mrf.mxu0
        %v500 = vadd.f32 0.0, %v499
        %v501 = vpop.f32.mrf.mxu0
        %502 = vmatprep.mubr.f32.mxu0 0.0
        %503 = vmatmul.mubr.f32.gmra.mxu0 %v307
        %v504 = vpop.f32.mrf.mxu0
        %v505 = vadd.f32 0.0, %v504
        %v506 = vpop.f32.mrf.mxu0
        %507 = vmatprep.mubr.f32.mxu0 0.0
        %508 = vmatmul.mubr.f32.gmra.mxu0 %v310
        %v509 = vpop.f32.mrf.mxu0
        %v510 = vadd.f32 0.0, %v509
        %v511 = vpop.f32.mrf.mxu0
        %512 = vmatprep.mubr.f32.mxu0 0.0
        %513 = vmatmul.mubr.f32.gmra.mxu0 %v313
        %v514 = vpop.f32.mrf.mxu0
        %v515 = vadd.f32 0.0, %v514
        %v516 = vpop.f32.mrf.mxu0
        %517 = vmatprep.mubr.f32.mxu0 0.0
        %518 = vmatmul.mubr.f32.gmra.mxu0 %v316
        %v519 = vpop.f32.mrf.mxu0
        %v520 = vadd.f32 0.0, %v519
        %v521 = vpop.f32.mrf.mxu0
        %522 = vmatprep.mubr.f32.mxu0 0.0
        %523 = vmatmul.mubr.f32.gmra.mxu0 %v319
        %v524 = vpop.f32.mrf.mxu0
        %v525 = vadd.f32 0.0, %v524
        %v526 = vpop.f32.mrf.mxu0
        %527 = vmatprep.mubr.f32.mxu0 0.0
        %528 = vmatmul.mubr.f32.gmra.mxu0 %v322
        %v529 = vpop.f32.mrf.mxu0
        %v530 = vadd.f32 0.0, %v529
        %v531 = vpop.f32.mrf.mxu0
        %532 = vmatprep.mubr.f32.mxu0 0.0
        %533 = vmatmul.mubr.f32.gmra.mxu0 %v325
        %v534 = vpop.f32.mrf.mxu0
        %v535 = vadd.f32 0.0, %v534
        %v536 = vpop.f32.mrf.mxu0
        %537 = vmatprep.mubr.f32.mxu0 0.0
        %538 = vmatmul.mubr.f32.gmra.mxu0 %v328
        %v539 = vpop.f32.mrf.mxu0
        %v540 = vadd.f32 0.0, %v539
        %v541 = vpop.f32.mrf.mxu0
        %542 = vmatprep.mubr.f32.mxu0 0.0
        %543 = vmatmul.mubr.f32.gmra.mxu0 %v331
        %v544 = vpop.f32.mrf.mxu0
        %v545 = vadd.f32 0.0, %v544
        %v546 = vpop.f32.mrf.mxu0
        %547 = vmatprep.mubr.f32.mxu0 0.0
        %548 = vmatmul.mubr.f32.gmra.mxu0 %v334
        %v549 = vpop.f32.mrf.mxu0
        %v550 = vadd.f32 0.0, %v549
        %v551 = vpop.f32.mrf.mxu0
        %552 = vmatprep.mubr.f32.mxu0 0.0
        %553 = vmatmul.mubr.f32.gmra.mxu0 %v337
        %v554 = vpop.f32.mrf.mxu0
        %v555 = vadd.f32 0.0, %v554
        %v556 = vpop.f32.mrf.mxu0
        %557 = vmatprep.mubr.f32.mxu0 0.0
        %558 = vmatmul.mubr.f32.gmra.mxu0 %v340
        %v559 = vpop.f32.mrf.mxu0
        %v560 = vadd.f32 0.0, %v559
        %v561 = vpop.f32.mrf.mxu0
        %562 = vmatprep.mubr.f32.mxu0 0.0
        %563 = vmatmul.mubr.f32.gmra.mxu0 %v343
        %v564 = vpop.f32.mrf.mxu0
        %v565 = vadd.f32 0.0, %v564
        %v566 = vpop.f32.mrf.mxu0
        %567 = vmatprep.mubr.f32.mxu0 0.0
        %568 = vmatmul.mubr.f32.gmra.mxu0 %v346
        %v569 = vpop.f32.mrf.mxu0
        %v570 = vadd.f32 0.0, %v569
        %v571 = vpop.f32.mrf.mxu0
        %572 = vmatprep.mubr.f32.mxu0 0.0
        %573 = vmatmul.mubr.f32.gmra.mxu0 %v349
        %v574 = vpop.f32.mrf.mxu0
        %v575 = vadd.f32 0.0, %v574
        %v576 = vpop.f32.mrf.mxu0
        %577 = vmatprep.mubr.f32.mxu0 0.0
        %578 = vmatmul.mubr.f32.gmra.mxu0 %v352
        %v579 = vpop.f32.mrf.mxu0
        %v580 = vadd.f32 0.0, %v579
        %v581 = vpop.f32.mrf.mxu0
        %582 = vdwg.mxu0
        %v583 = vmul.f32 %v425, 2.0
        %v584 = vmul.f32 %v430, 2.0
        %v585 = vmul.f32 %v435, 2.0
        %v586 = vmul.f32 %v440, 2.0
        %v587 = vmul.f32 %v445, 2.0
        %v588 = vmul.f32 %v450, 2.0
        %v589 = vmul.f32 %v455, 2.0
        %v590 = vmul.f32 %v460, 2.0
        %v591 = vmul.f32 %v465, 2.0
        %v592 = vmul.f32 %v470, 2.0
        %v593 = vmul.f32 %v475, 2.0
        %v594 = vmul.f32 %v480, 2.0
        %v595 = vmul.f32 %v485, 2.0
        %v596 = vmul.f32 %v490, 2.0
        %v597 = vmul.f32 %v495, 2.0
        %v598 = vmul.f32 %v500, 2.0
        %v599 = vmul.f32 %v505, 2.0
        %v600 = vmul.f32 %v510, 2.0
        %v601 = vmul.f32 %v515, 2.0
        %v602 = vmul.f32 %v520, 2.0
        %v603 = vmul.f32 %v525, 2.0
        %v604 = vmul.f32 %v530, 2.0
        %v605 = vmul.f32 %v535, 2.0
        %v606 = vmul.f32 %v540, 2.0
        %v607 = vmul.f32 %v545, 2.0
        %v608 = vmul.f32 %v550, 2.0
        %v609 = vmul.f32 %v555, 2.0
        %v610 = vmul.f32 %v560, 2.0
        %v611 = vmul.f32 %v565, 2.0
        %v612 = vmul.f32 %v570, 2.0
        %v613 = vmul.f32 %v575, 2.0
        %v614 = vmul.f32 %v580, 2.0
        %616 = vset.pattern.permute.xlu0 0
        %617 = vperm.xlu0 %616, %v193
        %v618 = vpop.permute.xlu0 %617
        %621 = vset.pattern.permute.xlu0 0
        %622 = vperm.xlu0 %621, %v194
        %v623 = vpop.permute.xlu0 %622
        %626 = vset.pattern.permute.xlu0 0
        %627 = vperm.xlu0 %626, %v195
        %v628 = vpop.permute.xlu0 %627
        %631 = vset.pattern.permute.xlu0 0
        %632 = vperm.xlu0 %631, %v196
        %v633 = vpop.permute.xlu0 %632
        %636 = vset.pattern.permute.xlu0 0
        %637 = vperm.xlu0 %636, %v197
        %v638 = vpop.permute.xlu0 %637
        %641 = vset.pattern.permute.xlu0 0
        %642 = vperm.xlu0 %641, %v198
        %v643 = vpop.permute.xlu0 %642
        %646 = vset.pattern.permute.xlu0 0
        %647 = vperm.xlu0 %646, %v199
        %v648 = vpop.permute.xlu0 %647
        %651 = vset.pattern.permute.xlu0 0
        %652 = vperm.xlu0 %651, %v200
        %v653 = vpop.permute.xlu0 %652
        %656 = vset.pattern.permute.xlu0 0
        %657 = vperm.xlu0 %656, %v201
        %v658 = vpop.permute.xlu0 %657
        %661 = vset.pattern.permute.xlu0 0
        %662 = vperm.xlu0 %661, %v202
        %v663 = vpop.permute.xlu0 %662
        %666 = vset.pattern.permute.xlu0 0
        %667 = vperm.xlu0 %666, %v203
        %v668 = vpop.permute.xlu0 %667
        %671 = vset.pattern.permute.xlu0 0
        %672 = vperm.xlu0 %671, %v204
        %v673 = vpop.permute.xlu0 %672
        %676 = vset.pattern.permute.xlu0 0
        %677 = vperm.xlu0 %676, %v205
        %v678 = vpop.permute.xlu0 %677
        %681 = vset.pattern.permute.xlu0 0
        %682 = vperm.xlu0 %681, %v206
        %v683 = vpop.permute.xlu0 %682
        %686 = vset.pattern.permute.xlu0 0
        %687 = vperm.xlu0 %686, %v207
        %v688 = vpop.permute.xlu0 %687
        %691 = vset.pattern.permute.xlu0 0
        %692 = vperm.xlu0 %691, %v208
        %v693 = vpop.permute.xlu0 %692
        %696 = vset.pattern.permute.xlu0 0
        %697 = vperm.xlu0 %696, %v209
        %v698 = vpop.permute.xlu0 %697
        %701 = vset.pattern.permute.xlu0 0
        %702 = vperm.xlu0 %701, %v210
        %v703 = vpop.permute.xlu0 %702
        %706 = vset.pattern.permute.xlu0 0
        %707 = vperm.xlu0 %706, %v211
        %v708 = vpop.permute.xlu0 %707
        %711 = vset.pattern.permute.xlu0 0
        %712 = vperm.xlu0 %711, %v212
        %v713 = vpop.permute.xlu0 %712
        %716 = vset.pattern.permute.xlu0 0
        %717 = vperm.xlu0 %716, %v213
        %v718 = vpop.permute.xlu0 %717
        %721 = vset.pattern.permute.xlu0 0
        %722 = vperm.xlu0 %721, %v214
        %v723 = vpop.permute.xlu0 %722
        %726 = vset.pattern.permute.xlu0 0
        %727 = vperm.xlu0 %726, %v215
        %v728 = vpop.permute.xlu0 %727
        %731 = vset.pattern.permute.xlu0 0
        %732 = vperm.xlu0 %731, %v216
        %v733 = vpop.permute.xlu0 %732
        %736 = vset.pattern.permute.xlu0 0
        %737 = vperm.xlu0 %736, %v217
        %v738 = vpop.permute.xlu0 %737
        %741 = vset.pattern.permute.xlu0 0
        %742 = vperm.xlu0 %741, %v218
        %v743 = vpop.permute.xlu0 %742
        %746 = vset.pattern.permute.xlu0 0
        %747 = vperm.xlu0 %746, %v219
        %v748 = vpop.permute.xlu0 %747
        %751 = vset.pattern.permute.xlu0 0
        %752 = vperm.xlu0 %751, %v220
        %v753 = vpop.permute.xlu0 %752
        %756 = vset.pattern.permute.xlu0 0
        %757 = vperm.xlu0 %756, %v221
        %v758 = vpop.permute.xlu0 %757
        %761 = vset.pattern.permute.xlu0 0
        %762 = vperm.xlu0 %761, %v222
        %v763 = vpop.permute.xlu0 %762
        %766 = vset.pattern.permute.xlu0 0
        %767 = vperm.xlu0 %766, %v223
        %v768 = vpop.permute.xlu0 %767
        %771 = vset.pattern.permute.xlu0 0
        %772 = vperm.xlu0 %771, %v224
        %v773 = vpop.permute.xlu0 %772
        %v775 = vsub.f32 %v618, %v583
        %v776 = vsub.f32 %v623, %v584
        %v777 = vsub.f32 %v628, %v585
        %v778 = vsub.f32 %v633, %v586
        %v779 = vsub.f32 %v638, %v587
        %v780 = vsub.f32 %v643, %v588
        %v781 = vsub.f32 %v648, %v589
        %v782 = vsub.f32 %v653, %v590
        %v783 = vsub.f32 %v658, %v591
        %v784 = vsub.f32 %v663, %v592
        %v785 = vsub.f32 %v668, %v593
        %v786 = vsub.f32 %v673, %v594
        %v787 = vsub.f32 %v678, %v595
        %v788 = vsub.f32 %v683, %v596
        %v789 = vsub.f32 %v688, %v597
        %v790 = vsub.f32 %v693, %v598
        %v791 = vsub.f32 %v698, %v599
        %v792 = vsub.f32 %v703, %v600
        %v793 = vsub.f32 %v708, %v601
        %v794 = vsub.f32 %v713, %v602
        %v795 = vsub.f32 %v718, %v603
        %v796 = vsub.f32 %v723, %v604
        %v797 = vsub.f32 %v728, %v605
        %v798 = vsub.f32 %v733, %v606
        %v799 = vsub.f32 %v738, %v607
        %v800 = vsub.f32 %v743, %v608
        %v801 = vsub.f32 %v748, %v609
        %v802 = vsub.f32 %v753, %v610
        %v803 = vsub.f32 %v758, %v611
        %v804 = vsub.f32 %v763, %v612
        %v805 = vsub.f32 %v768, %v613
        %v806 = vsub.f32 %v773, %v614
        %v807 = vmin.f32 %v775, %v779
        %v808 = vmin.f32 %v776, %v780
        %v809 = vmin.f32 %v777, %v781
        %v810 = vmin.f32 %v778, %v782
        %v811 = vmin.f32 %v807, %v783
        %v812 = vmin.f32 %v808, %v784
        %v813 = vmin.f32 %v809, %v785
        %v814 = vmin.f32 %v810, %v786
        %v815 = vmin.f32 %v811, %v787
        %v816 = vmin.f32 %v812, %v788
        %v817 = vmin.f32 %v813, %v789
        %v818 = vmin.f32 %v814, %v790
        %v819 = vmin.f32 %v815, %v791
        %v820 = vmin.f32 %v816, %v792
        %v821 = vmin.f32 %v817, %v793
        %v822 = vmin.f32 %v818, %v794
        %v823 = vmin.f32 %v819, %v795
        %v824 = vmin.f32 %v820, %v796
        %v825 = vmin.f32 %v821, %v797
        %v826 = vmin.f32 %v822, %v798
        %v827 = vmin.f32 %v823, %v799
        %v828 = vmin.f32 %v824, %v800
        %v829 = vmin.f32 %v825, %v801
        %v830 = vmin.f32 %v826, %v802
        %v831 = vmin.f32 %v827, %v803
        %v832 = vmin.f32 %v828, %v804
        %v833 = vmin.f32 %v829, %v805
        %v834 = vmin.f32 %v830, %v806
        %v835 = vmin.f32 %v831, %v832
        %v836 = vmin.f32 %v833, %v834
        %v837 = vmin.f32 %v835, %v836
        %v838 = vrot.slane %v837, 4
        %v839 = vmin.f32 %v837, %v838
        %v840 = vrot.slane %v839, 2
        %v841 = vmin.f32 %v839, %v840
        %v842 = vrot.slane %v841, 1
        %v843 = vmin.f32 %v841, %v842
        %vm844 = vcmp.le.f32.partialorder %v775, %v843
        %vm845 = vcmp.le.f32.partialorder %v776, %v843
        %vm846 = vcmp.le.f32.partialorder %v777, %v843
        %vm847 = vcmp.le.f32.partialorder %v778, %v843
        %vm848 = vcmp.le.f32.partialorder %v779, %v843
        %vm849 = vcmp.le.f32.partialorder %v780, %v843
        %vm850 = vcmp.le.f32.partialorder %v781, %v843
        %vm851 = vcmp.le.f32.partialorder %v782, %v843
        %vm852 = vcmp.le.f32.partialorder %v783, %v843
        %vm853 = vcmp.le.f32.partialorder %v784, %v843
        %vm854 = vcmp.le.f32.partialorder %v785, %v843
        %vm855 = vcmp.le.f32.partialorder %v786, %v843
        %vm856 = vcmp.le.f32.partialorder %v787, %v843
        %vm857 = vcmp.le.f32.partialorder %v788, %v843
        %vm858 = vcmp.le.f32.partialorder %v789, %v843
        %vm859 = vcmp.le.f32.partialorder %v790, %v843
        %vm860 = vcmp.le.f32.partialorder %v791, %v843
        %vm861 = vcmp.le.f32.partialorder %v792, %v843
        %vm862 = vcmp.le.f32.partialorder %v793, %v843
        %vm863 = vcmp.le.f32.partialorder %v794, %v843
        %vm864 = vcmp.le.f32.partialorder %v795, %v843
        %vm865 = vcmp.le.f32.partialorder %v796, %v843
        %vm866 = vcmp.le.f32.partialorder %v797, %v843
        %vm867 = vcmp.le.f32.partialorder %v798, %v843
        %vm868 = vcmp.le.f32.partialorder %v799, %v843
        %vm869 = vcmp.le.f32.partialorder %v800, %v843
        %vm870 = vcmp.le.f32.partialorder %v801, %v843
        %vm871 = vcmp.le.f32.partialorder %v802, %v843
        %vm872 = vcmp.le.f32.partialorder %v803, %v843
        %vm873 = vcmp.le.f32.partialorder %v804, %v843
        %vm874 = vcmp.le.f32.partialorder %v805, %v843
        %vm875 = vcmp.le.f32.partialorder %v806, %v843
        %v876 = vsel %vm844, 3e+38, %v775
        %v877 = vsel %vm845, 3e+38, %v776
        %v878 = vsel %vm846, 3e+38, %v777
        %v879 = vsel %vm847, 3e+38, %v778
        %v880 = vsel %vm848, 3e+38, %v779
        %v881 = vsel %vm849, 3e+38, %v780
        %v882 = vsel %vm850, 3e+38, %v781
        %v883 = vsel %vm851, 3e+38, %v782
        %v884 = vsel %vm852, 3e+38, %v783
        %v885 = vsel %vm853, 3e+38, %v784
        %v886 = vsel %vm854, 3e+38, %v785
        %v887 = vsel %vm855, 3e+38, %v786
        %v888 = vsel %vm856, 3e+38, %v787
        %v889 = vsel %vm857, 3e+38, %v788
        %v890 = vsel %vm858, 3e+38, %v789
        %v891 = vsel %vm859, 3e+38, %v790
        %v892 = vsel %vm860, 3e+38, %v791
        %v893 = vsel %vm861, 3e+38, %v792
        %v894 = vsel %vm862, 3e+38, %v793
        %v895 = vsel %vm863, 3e+38, %v794
        %v896 = vsel %vm864, 3e+38, %v795
        %v897 = vsel %vm865, 3e+38, %v796
        %v898 = vsel %vm866, 3e+38, %v797
        %v899 = vsel %vm867, 3e+38, %v798
        %v900 = vsel %vm868, 3e+38, %v799
        %v901 = vsel %vm869, 3e+38, %v800
        %v902 = vsel %vm870, 3e+38, %v801
        %v903 = vsel %vm871, 3e+38, %v802
        %v904 = vsel %vm872, 3e+38, %v803
        %v905 = vsel %vm873, 3e+38, %v804
        %v906 = vsel %vm874, 3e+38, %v805
        %v907 = vsel %vm875, 3e+38, %v806
        %v908 = vmin.f32 %v876, %v880
        %v909 = vmin.f32 %v877, %v881
        %v910 = vmin.f32 %v878, %v882
        %v911 = vmin.f32 %v879, %v883
        %v912 = vmin.f32 %v908, %v884
        %v913 = vmin.f32 %v909, %v885
        %v914 = vmin.f32 %v910, %v886
        %v915 = vmin.f32 %v911, %v887
        %v916 = vmin.f32 %v912, %v888
        %v917 = vmin.f32 %v913, %v889
        %v918 = vmin.f32 %v914, %v890
        %v919 = vmin.f32 %v915, %v891
        %v920 = vmin.f32 %v916, %v892
        %v921 = vmin.f32 %v917, %v893
        %v922 = vmin.f32 %v918, %v894
        %v923 = vmin.f32 %v919, %v895
        %v924 = vmin.f32 %v920, %v896
        %v925 = vmin.f32 %v921, %v897
        %v926 = vmin.f32 %v922, %v898
        %v927 = vmin.f32 %v923, %v899
        %v928 = vmin.f32 %v924, %v900
        %v929 = vmin.f32 %v925, %v901
        %v930 = vmin.f32 %v926, %v902
        %v931 = vmin.f32 %v927, %v903
        %v932 = vmin.f32 %v928, %v904
        %v933 = vmin.f32 %v929, %v905
        %v934 = vmin.f32 %v930, %v906
        %v935 = vmin.f32 %v931, %v907
        %v936 = vmin.f32 %v932, %v933
        %v937 = vmin.f32 %v934, %v935
        %v938 = vmin.f32 %v936, %v937
        %v939 = vrot.slane %v938, 4
        %v940 = vmin.f32 %v938, %v939
        %v941 = vrot.slane %v940, 2
        %v942 = vmin.f32 %v940, %v941
        %v943 = vrot.slane %v942, 1
        %v944 = vmin.f32 %v942, %v943
        %vm945 = vcmp.le.f32.partialorder %v876, %v944
        %vm946 = vcmp.le.f32.partialorder %v877, %v944
        %vm947 = vcmp.le.f32.partialorder %v878, %v944
        %vm948 = vcmp.le.f32.partialorder %v879, %v944
        %vm949 = vcmp.le.f32.partialorder %v880, %v944
        %vm950 = vcmp.le.f32.partialorder %v881, %v944
        %vm951 = vcmp.le.f32.partialorder %v882, %v944
        %vm952 = vcmp.le.f32.partialorder %v883, %v944
        %vm953 = vcmp.le.f32.partialorder %v884, %v944
        %vm954 = vcmp.le.f32.partialorder %v885, %v944
        %vm955 = vcmp.le.f32.partialorder %v886, %v944
        %vm956 = vcmp.le.f32.partialorder %v887, %v944
        %vm957 = vcmp.le.f32.partialorder %v888, %v944
        %vm958 = vcmp.le.f32.partialorder %v889, %v944
        %vm959 = vcmp.le.f32.partialorder %v890, %v944
        %vm960 = vcmp.le.f32.partialorder %v891, %v944
        %vm961 = vcmp.le.f32.partialorder %v892, %v944
        %vm962 = vcmp.le.f32.partialorder %v893, %v944
        %vm963 = vcmp.le.f32.partialorder %v894, %v944
        %vm964 = vcmp.le.f32.partialorder %v895, %v944
        %vm965 = vcmp.le.f32.partialorder %v896, %v944
        %vm966 = vcmp.le.f32.partialorder %v897, %v944
        %vm967 = vcmp.le.f32.partialorder %v898, %v944
        %vm968 = vcmp.le.f32.partialorder %v899, %v944
        %vm969 = vcmp.le.f32.partialorder %v900, %v944
        %vm970 = vcmp.le.f32.partialorder %v901, %v944
        %vm971 = vcmp.le.f32.partialorder %v902, %v944
        %vm972 = vcmp.le.f32.partialorder %v903, %v944
        %vm973 = vcmp.le.f32.partialorder %v904, %v944
        %vm974 = vcmp.le.f32.partialorder %v905, %v944
        %vm975 = vcmp.le.f32.partialorder %v906, %v944
        %vm976 = vcmp.le.f32.partialorder %v907, %v944
        %v977 = vsel %vm945, 3e+38, %v876
        %v978 = vsel %vm946, 3e+38, %v877
        %v979 = vsel %vm947, 3e+38, %v878
        %v980 = vsel %vm948, 3e+38, %v879
        %v981 = vsel %vm949, 3e+38, %v880
        %v982 = vsel %vm950, 3e+38, %v881
        %v983 = vsel %vm951, 3e+38, %v882
        %v984 = vsel %vm952, 3e+38, %v883
        %v985 = vsel %vm953, 3e+38, %v884
        %v986 = vsel %vm954, 3e+38, %v885
        %v987 = vsel %vm955, 3e+38, %v886
        %v988 = vsel %vm956, 3e+38, %v887
        %v989 = vsel %vm957, 3e+38, %v888
        %v990 = vsel %vm958, 3e+38, %v889
        %v991 = vsel %vm959, 3e+38, %v890
        %v992 = vsel %vm960, 3e+38, %v891
        %v993 = vsel %vm961, 3e+38, %v892
        %v994 = vsel %vm962, 3e+38, %v893
        %v995 = vsel %vm963, 3e+38, %v894
        %v996 = vsel %vm964, 3e+38, %v895
        %v997 = vsel %vm965, 3e+38, %v896
        %v998 = vsel %vm966, 3e+38, %v897
        %v999 = vsel %vm967, 3e+38, %v898
        %v1000 = vsel %vm968, 3e+38, %v899
        %v1001 = vsel %vm969, 3e+38, %v900
        %v1002 = vsel %vm970, 3e+38, %v901
        %v1003 = vsel %vm971, 3e+38, %v902
        %v1004 = vsel %vm972, 3e+38, %v903
        %v1005 = vsel %vm973, 3e+38, %v904
        %v1006 = vsel %vm974, 3e+38, %v905
        %v1007 = vsel %vm975, 3e+38, %v906
        %v1008 = vsel %vm976, 3e+38, %v907
        %v1009 = vmin.f32 %v977, %v981
        %v1010 = vmin.f32 %v978, %v982
        %v1011 = vmin.f32 %v979, %v983
        %v1012 = vmin.f32 %v980, %v984
        %v1013 = vmin.f32 %v1009, %v985
        %v1014 = vmin.f32 %v1010, %v986
        %v1015 = vmin.f32 %v1011, %v987
        %v1016 = vmin.f32 %v1012, %v988
        %v1017 = vmin.f32 %v1013, %v989
        %v1018 = vmin.f32 %v1014, %v990
        %v1019 = vmin.f32 %v1015, %v991
        %v1020 = vmin.f32 %v1016, %v992
        %v1021 = vmin.f32 %v1017, %v993
        %v1022 = vmin.f32 %v1018, %v994
        %v1023 = vmin.f32 %v1019, %v995
        %v1024 = vmin.f32 %v1020, %v996
        %v1025 = vmin.f32 %v1021, %v997
        %v1026 = vmin.f32 %v1022, %v998
        %v1027 = vmin.f32 %v1023, %v999
        %v1028 = vmin.f32 %v1024, %v1000
        %v1029 = vmin.f32 %v1025, %v1001
        %v1030 = vmin.f32 %v1026, %v1002
        %v1031 = vmin.f32 %v1027, %v1003
        %v1032 = vmin.f32 %v1028, %v1004
        %v1033 = vmin.f32 %v1029, %v1005
        %v1034 = vmin.f32 %v1030, %v1006
        %v1035 = vmin.f32 %v1031, %v1007
        %v1036 = vmin.f32 %v1032, %v1008
        %v1037 = vmin.f32 %v1033, %v1034
        %v1038 = vmin.f32 %v1035, %v1036
        %v1039 = vmin.f32 %v1037, %v1038
        %v1040 = vrot.slane %v1039, 4
        %v1041 = vmin.f32 %v1039, %v1040
        %v1042 = vrot.slane %v1041, 2
        %v1043 = vmin.f32 %v1041, %v1042
        %v1044 = vrot.slane %v1043, 1
        %v1045 = vmin.f32 %v1043, %v1044
        %vm1046 = vcmp.le.f32.partialorder %v977, %v1045
        %vm1047 = vcmp.le.f32.partialorder %v978, %v1045
        %vm1048 = vcmp.le.f32.partialorder %v979, %v1045
        %vm1049 = vcmp.le.f32.partialorder %v980, %v1045
        %vm1050 = vcmp.le.f32.partialorder %v981, %v1045
        %vm1051 = vcmp.le.f32.partialorder %v982, %v1045
        %vm1052 = vcmp.le.f32.partialorder %v983, %v1045
        %vm1053 = vcmp.le.f32.partialorder %v984, %v1045
        %vm1054 = vcmp.le.f32.partialorder %v985, %v1045
        %vm1055 = vcmp.le.f32.partialorder %v986, %v1045
        %vm1056 = vcmp.le.f32.partialorder %v987, %v1045
        %vm1057 = vcmp.le.f32.partialorder %v988, %v1045
        %vm1058 = vcmp.le.f32.partialorder %v989, %v1045
        %vm1059 = vcmp.le.f32.partialorder %v990, %v1045
        %vm1060 = vcmp.le.f32.partialorder %v991, %v1045
        %vm1061 = vcmp.le.f32.partialorder %v992, %v1045
        %vm1062 = vcmp.le.f32.partialorder %v993, %v1045
        %vm1063 = vcmp.le.f32.partialorder %v994, %v1045
        %vm1064 = vcmp.le.f32.partialorder %v995, %v1045
        %vm1065 = vcmp.le.f32.partialorder %v996, %v1045
        %vm1066 = vcmp.le.f32.partialorder %v997, %v1045
        %vm1067 = vcmp.le.f32.partialorder %v998, %v1045
        %vm1068 = vcmp.le.f32.partialorder %v999, %v1045
        %vm1069 = vcmp.le.f32.partialorder %v1000, %v1045
        %vm1070 = vcmp.le.f32.partialorder %v1001, %v1045
        %vm1071 = vcmp.le.f32.partialorder %v1002, %v1045
        %vm1072 = vcmp.le.f32.partialorder %v1003, %v1045
        %vm1073 = vcmp.le.f32.partialorder %v1004, %v1045
        %vm1074 = vcmp.le.f32.partialorder %v1005, %v1045
        %vm1075 = vcmp.le.f32.partialorder %v1006, %v1045
        %vm1076 = vcmp.le.f32.partialorder %v1007, %v1045
        %vm1077 = vcmp.le.f32.partialorder %v1008, %v1045
        %v1078 = vsel %vm1046, 3e+38, %v977
        %v1079 = vsel %vm1047, 3e+38, %v978
        %v1080 = vsel %vm1048, 3e+38, %v979
        %v1081 = vsel %vm1049, 3e+38, %v980
        %v1082 = vsel %vm1050, 3e+38, %v981
        %v1083 = vsel %vm1051, 3e+38, %v982
        %v1084 = vsel %vm1052, 3e+38, %v983
        %v1085 = vsel %vm1053, 3e+38, %v984
        %v1086 = vsel %vm1054, 3e+38, %v985
        %v1087 = vsel %vm1055, 3e+38, %v986
        %v1088 = vsel %vm1056, 3e+38, %v987
        %v1089 = vsel %vm1057, 3e+38, %v988
        %v1090 = vsel %vm1058, 3e+38, %v989
        %v1091 = vsel %vm1059, 3e+38, %v990
        %v1092 = vsel %vm1060, 3e+38, %v991
        %v1093 = vsel %vm1061, 3e+38, %v992
        %v1094 = vsel %vm1062, 3e+38, %v993
        %v1095 = vsel %vm1063, 3e+38, %v994
        %v1096 = vsel %vm1064, 3e+38, %v995
        %v1097 = vsel %vm1065, 3e+38, %v996
        %v1098 = vsel %vm1066, 3e+38, %v997
        %v1099 = vsel %vm1067, 3e+38, %v998
        %v1100 = vsel %vm1068, 3e+38, %v999
        %v1101 = vsel %vm1069, 3e+38, %v1000
        %v1102 = vsel %vm1070, 3e+38, %v1001
        %v1103 = vsel %vm1071, 3e+38, %v1002
        %v1104 = vsel %vm1072, 3e+38, %v1003
        %v1105 = vsel %vm1073, 3e+38, %v1004
        %v1106 = vsel %vm1074, 3e+38, %v1005
        %v1107 = vsel %vm1075, 3e+38, %v1006
        %v1108 = vsel %vm1076, 3e+38, %v1007
        %v1109 = vsel %vm1077, 3e+38, %v1008
        %v1110 = vmin.f32 %v1078, %v1082
        %v1111 = vmin.f32 %v1079, %v1083
        %v1112 = vmin.f32 %v1080, %v1084
        %v1113 = vmin.f32 %v1081, %v1085
        %v1114 = vmin.f32 %v1110, %v1086
        %v1115 = vmin.f32 %v1111, %v1087
        %v1116 = vmin.f32 %v1112, %v1088
        %v1117 = vmin.f32 %v1113, %v1089
        %v1118 = vmin.f32 %v1114, %v1090
        %v1119 = vmin.f32 %v1115, %v1091
        %v1120 = vmin.f32 %v1116, %v1092
        %v1121 = vmin.f32 %v1117, %v1093
        %v1122 = vmin.f32 %v1118, %v1094
        %v1123 = vmin.f32 %v1119, %v1095
        %v1124 = vmin.f32 %v1120, %v1096
        %v1125 = vmin.f32 %v1121, %v1097
        %v1126 = vmin.f32 %v1122, %v1098
        %v1127 = vmin.f32 %v1123, %v1099
        %v1128 = vmin.f32 %v1124, %v1100
        %v1129 = vmin.f32 %v1125, %v1101
        %v1130 = vmin.f32 %v1126, %v1102
        %v1131 = vmin.f32 %v1127, %v1103
        %v1132 = vmin.f32 %v1128, %v1104
        %v1133 = vmin.f32 %v1129, %v1105
        %v1134 = vmin.f32 %v1130, %v1106
        %v1135 = vmin.f32 %v1131, %v1107
        %v1136 = vmin.f32 %v1132, %v1108
        %v1137 = vmin.f32 %v1133, %v1109
        %v1138 = vmin.f32 %v1134, %v1135
        %v1139 = vmin.f32 %v1136, %v1137
        %v1140 = vmin.f32 %v1138, %v1139
        %v1141 = vrot.slane %v1140, 4
        %v1142 = vmin.f32 %v1140, %v1141
        %v1143 = vrot.slane %v1142, 2
        %v1144 = vmin.f32 %v1142, %v1143
        %v1145 = vrot.slane %v1144, 1
        %v1146 = vmin.f32 %v1144, %v1145
        %vm1147 = vcmp.le.f32.partialorder %v1078, %v1146
        %vm1148 = vcmp.le.f32.partialorder %v1079, %v1146
        %vm1149 = vcmp.le.f32.partialorder %v1080, %v1146
        %vm1150 = vcmp.le.f32.partialorder %v1081, %v1146
        %vm1151 = vcmp.le.f32.partialorder %v1082, %v1146
        %vm1152 = vcmp.le.f32.partialorder %v1083, %v1146
        %vm1153 = vcmp.le.f32.partialorder %v1084, %v1146
        %vm1154 = vcmp.le.f32.partialorder %v1085, %v1146
        %vm1155 = vcmp.le.f32.partialorder %v1086, %v1146
        %vm1156 = vcmp.le.f32.partialorder %v1087, %v1146
        %vm1157 = vcmp.le.f32.partialorder %v1088, %v1146
        %vm1158 = vcmp.le.f32.partialorder %v1089, %v1146
        %vm1159 = vcmp.le.f32.partialorder %v1090, %v1146
        %vm1160 = vcmp.le.f32.partialorder %v1091, %v1146
        %vm1161 = vcmp.le.f32.partialorder %v1092, %v1146
        %vm1162 = vcmp.le.f32.partialorder %v1093, %v1146
        %vm1163 = vcmp.le.f32.partialorder %v1094, %v1146
        %vm1164 = vcmp.le.f32.partialorder %v1095, %v1146
        %vm1165 = vcmp.le.f32.partialorder %v1096, %v1146
        %vm1166 = vcmp.le.f32.partialorder %v1097, %v1146
        %vm1167 = vcmp.le.f32.partialorder %v1098, %v1146
        %vm1168 = vcmp.le.f32.partialorder %v1099, %v1146
        %vm1169 = vcmp.le.f32.partialorder %v1100, %v1146
        %vm1170 = vcmp.le.f32.partialorder %v1101, %v1146
        %vm1171 = vcmp.le.f32.partialorder %v1102, %v1146
        %vm1172 = vcmp.le.f32.partialorder %v1103, %v1146
        %vm1173 = vcmp.le.f32.partialorder %v1104, %v1146
        %vm1174 = vcmp.le.f32.partialorder %v1105, %v1146
        %vm1175 = vcmp.le.f32.partialorder %v1106, %v1146
        %vm1176 = vcmp.le.f32.partialorder %v1107, %v1146
        %vm1177 = vcmp.le.f32.partialorder %v1108, %v1146
        %vm1178 = vcmp.le.f32.partialorder %v1109, %v1146
        %v1179 = vsel %vm1147, 3e+38, %v1078
        %v1180 = vsel %vm1148, 3e+38, %v1079
        %v1181 = vsel %vm1149, 3e+38, %v1080
        %v1182 = vsel %vm1150, 3e+38, %v1081
        %v1183 = vsel %vm1151, 3e+38, %v1082
        %v1184 = vsel %vm1152, 3e+38, %v1083
        %v1185 = vsel %vm1153, 3e+38, %v1084
        %v1186 = vsel %vm1154, 3e+38, %v1085
        %v1187 = vsel %vm1155, 3e+38, %v1086
        %v1188 = vsel %vm1156, 3e+38, %v1087
        %v1189 = vsel %vm1157, 3e+38, %v1088
        %v1190 = vsel %vm1158, 3e+38, %v1089
        %v1191 = vsel %vm1159, 3e+38, %v1090
        %v1192 = vsel %vm1160, 3e+38, %v1091
        %v1193 = vsel %vm1161, 3e+38, %v1092
        %v1194 = vsel %vm1162, 3e+38, %v1093
        %v1195 = vsel %vm1163, 3e+38, %v1094
        %v1196 = vsel %vm1164, 3e+38, %v1095
        %v1197 = vsel %vm1165, 3e+38, %v1096
        %v1198 = vsel %vm1166, 3e+38, %v1097
        %v1199 = vsel %vm1167, 3e+38, %v1098
        %v1200 = vsel %vm1168, 3e+38, %v1099
        %v1201 = vsel %vm1169, 3e+38, %v1100
        %v1202 = vsel %vm1170, 3e+38, %v1101
        %v1203 = vsel %vm1171, 3e+38, %v1102
        %v1204 = vsel %vm1172, 3e+38, %v1103
        %v1205 = vsel %vm1173, 3e+38, %v1104
        %v1206 = vsel %vm1174, 3e+38, %v1105
        %v1207 = vsel %vm1175, 3e+38, %v1106
        %v1208 = vsel %vm1176, 3e+38, %v1107
        %v1209 = vsel %vm1177, 3e+38, %v1108
        %v1210 = vsel %vm1178, 3e+38, %v1109
        %v1211 = vmin.f32 %v1179, %v1183
        %v1212 = vmin.f32 %v1180, %v1184
        %v1213 = vmin.f32 %v1181, %v1185
        %v1214 = vmin.f32 %v1182, %v1186
        %v1215 = vmin.f32 %v1211, %v1187
        %v1216 = vmin.f32 %v1212, %v1188
        %v1217 = vmin.f32 %v1213, %v1189
        %v1218 = vmin.f32 %v1214, %v1190
        %v1219 = vmin.f32 %v1215, %v1191
        %v1220 = vmin.f32 %v1216, %v1192
        %v1221 = vmin.f32 %v1217, %v1193
        %v1222 = vmin.f32 %v1218, %v1194
        %v1223 = vmin.f32 %v1219, %v1195
        %v1224 = vmin.f32 %v1220, %v1196
        %v1225 = vmin.f32 %v1221, %v1197
        %v1226 = vmin.f32 %v1222, %v1198
        %v1227 = vmin.f32 %v1223, %v1199
        %v1228 = vmin.f32 %v1224, %v1200
        %v1229 = vmin.f32 %v1225, %v1201
        %v1230 = vmin.f32 %v1226, %v1202
        %v1231 = vmin.f32 %v1227, %v1203
        %v1232 = vmin.f32 %v1228, %v1204
        %v1233 = vmin.f32 %v1229, %v1205
        %v1234 = vmin.f32 %v1230, %v1206
        %v1235 = vmin.f32 %v1231, %v1207
        %v1236 = vmin.f32 %v1232, %v1208
        %v1237 = vmin.f32 %v1233, %v1209
        %v1238 = vmin.f32 %v1234, %v1210
        %v1239 = vmin.f32 %v1235, %v1236
        %v1240 = vmin.f32 %v1237, %v1238
        %v1241 = vmin.f32 %v1239, %v1240
        %v1242 = vrot.slane %v1241, 4
        %v1243 = vmin.f32 %v1241, %v1242
        %v1244 = vrot.slane %v1243, 2
        %v1245 = vmin.f32 %v1243, %v1244
        %v1246 = vrot.slane %v1245, 1
        %v1247 = vmin.f32 %v1245, %v1246
        %vm1248 = vcmp.le.f32.partialorder %v1179, %v1247
        %vm1249 = vcmp.le.f32.partialorder %v1180, %v1247
        %vm1250 = vcmp.le.f32.partialorder %v1181, %v1247
        %vm1251 = vcmp.le.f32.partialorder %v1182, %v1247
        %vm1252 = vcmp.le.f32.partialorder %v1183, %v1247
        %vm1253 = vcmp.le.f32.partialorder %v1184, %v1247
        %vm1254 = vcmp.le.f32.partialorder %v1185, %v1247
        %vm1255 = vcmp.le.f32.partialorder %v1186, %v1247
        %vm1256 = vcmp.le.f32.partialorder %v1187, %v1247
        %vm1257 = vcmp.le.f32.partialorder %v1188, %v1247
        %vm1258 = vcmp.le.f32.partialorder %v1189, %v1247
        %vm1259 = vcmp.le.f32.partialorder %v1190, %v1247
        %vm1260 = vcmp.le.f32.partialorder %v1191, %v1247
        %vm1261 = vcmp.le.f32.partialorder %v1192, %v1247
        %vm1262 = vcmp.le.f32.partialorder %v1193, %v1247
        %vm1263 = vcmp.le.f32.partialorder %v1194, %v1247
        %vm1264 = vcmp.le.f32.partialorder %v1195, %v1247
        %vm1265 = vcmp.le.f32.partialorder %v1196, %v1247
        %vm1266 = vcmp.le.f32.partialorder %v1197, %v1247
        %vm1267 = vcmp.le.f32.partialorder %v1198, %v1247
        %vm1268 = vcmp.le.f32.partialorder %v1199, %v1247
        %vm1269 = vcmp.le.f32.partialorder %v1200, %v1247
        %vm1270 = vcmp.le.f32.partialorder %v1201, %v1247
        %vm1271 = vcmp.le.f32.partialorder %v1202, %v1247
        %vm1272 = vcmp.le.f32.partialorder %v1203, %v1247
        %vm1273 = vcmp.le.f32.partialorder %v1204, %v1247
        %vm1274 = vcmp.le.f32.partialorder %v1205, %v1247
        %vm1275 = vcmp.le.f32.partialorder %v1206, %v1247
        %vm1276 = vcmp.le.f32.partialorder %v1207, %v1247
        %vm1277 = vcmp.le.f32.partialorder %v1208, %v1247
        %vm1278 = vcmp.le.f32.partialorder %v1209, %v1247
        %vm1279 = vcmp.le.f32.partialorder %v1210, %v1247
        %v1280 = vsel %vm1248, 3e+38, %v1179
        %v1281 = vsel %vm1249, 3e+38, %v1180
        %v1282 = vsel %vm1250, 3e+38, %v1181
        %v1283 = vsel %vm1251, 3e+38, %v1182
        %v1284 = vsel %vm1252, 3e+38, %v1183
        %v1285 = vsel %vm1253, 3e+38, %v1184
        %v1286 = vsel %vm1254, 3e+38, %v1185
        %v1287 = vsel %vm1255, 3e+38, %v1186
        %v1288 = vsel %vm1256, 3e+38, %v1187
        %v1289 = vsel %vm1257, 3e+38, %v1188
        %v1290 = vsel %vm1258, 3e+38, %v1189
        %v1291 = vsel %vm1259, 3e+38, %v1190
        %v1292 = vsel %vm1260, 3e+38, %v1191
        %v1293 = vsel %vm1261, 3e+38, %v1192
        %v1294 = vsel %vm1262, 3e+38, %v1193
        %v1295 = vsel %vm1263, 3e+38, %v1194
        %v1296 = vsel %vm1264, 3e+38, %v1195
        %v1297 = vsel %vm1265, 3e+38, %v1196
        %v1298 = vsel %vm1266, 3e+38, %v1197
        %v1299 = vsel %vm1267, 3e+38, %v1198
        %v1300 = vsel %vm1268, 3e+38, %v1199
        %v1301 = vsel %vm1269, 3e+38, %v1200
        %v1302 = vsel %vm1270, 3e+38, %v1201
        %v1303 = vsel %vm1271, 3e+38, %v1202
        %v1304 = vsel %vm1272, 3e+38, %v1203
        %v1305 = vsel %vm1273, 3e+38, %v1204
        %v1306 = vsel %vm1274, 3e+38, %v1205
        %v1307 = vsel %vm1275, 3e+38, %v1206
        %v1308 = vsel %vm1276, 3e+38, %v1207
        %v1309 = vsel %vm1277, 3e+38, %v1208
        %v1310 = vsel %vm1278, 3e+38, %v1209
        %v1311 = vsel %vm1279, 3e+38, %v1210
        %v1312 = vmin.f32 %v1280, %v1284
        %v1313 = vmin.f32 %v1281, %v1285
        %v1314 = vmin.f32 %v1282, %v1286
        %v1315 = vmin.f32 %v1283, %v1287
        %v1316 = vmin.f32 %v1312, %v1288
        %v1317 = vmin.f32 %v1313, %v1289
        %v1318 = vmin.f32 %v1314, %v1290
        %v1319 = vmin.f32 %v1315, %v1291
        %v1320 = vmin.f32 %v1316, %v1292
        %v1321 = vmin.f32 %v1317, %v1293
        %v1322 = vmin.f32 %v1318, %v1294
        %v1323 = vmin.f32 %v1319, %v1295
        %v1324 = vmin.f32 %v1320, %v1296
        %v1325 = vmin.f32 %v1321, %v1297
        %v1326 = vmin.f32 %v1322, %v1298
        %v1327 = vmin.f32 %v1323, %v1299
        %v1328 = vmin.f32 %v1324, %v1300
        %v1329 = vmin.f32 %v1325, %v1301
        %v1330 = vmin.f32 %v1326, %v1302
        %v1331 = vmin.f32 %v1327, %v1303
        %v1332 = vmin.f32 %v1328, %v1304
        %v1333 = vmin.f32 %v1329, %v1305
        %v1334 = vmin.f32 %v1330, %v1306
        %v1335 = vmin.f32 %v1331, %v1307
        %v1336 = vmin.f32 %v1332, %v1308
        %v1337 = vmin.f32 %v1333, %v1309
        %v1338 = vmin.f32 %v1334, %v1310
        %v1339 = vmin.f32 %v1335, %v1311
        %v1340 = vmin.f32 %v1336, %v1337
        %v1341 = vmin.f32 %v1338, %v1339
        %v1342 = vmin.f32 %v1340, %v1341
        %v1343 = vrot.slane %v1342, 4
        %v1344 = vmin.f32 %v1342, %v1343
        %v1345 = vrot.slane %v1344, 2
        %v1346 = vmin.f32 %v1344, %v1345
        %v1347 = vrot.slane %v1346, 1
        %v1348 = vmin.f32 %v1346, %v1347
        %vm1349 = vcmp.le.f32.partialorder %v1280, %v1348
        %vm1350 = vcmp.le.f32.partialorder %v1281, %v1348
        %vm1351 = vcmp.le.f32.partialorder %v1282, %v1348
        %vm1352 = vcmp.le.f32.partialorder %v1283, %v1348
        %vm1353 = vcmp.le.f32.partialorder %v1284, %v1348
        %vm1354 = vcmp.le.f32.partialorder %v1285, %v1348
        %vm1355 = vcmp.le.f32.partialorder %v1286, %v1348
        %vm1356 = vcmp.le.f32.partialorder %v1287, %v1348
        %vm1357 = vcmp.le.f32.partialorder %v1288, %v1348
        %vm1358 = vcmp.le.f32.partialorder %v1289, %v1348
        %vm1359 = vcmp.le.f32.partialorder %v1290, %v1348
        %vm1360 = vcmp.le.f32.partialorder %v1291, %v1348
        %vm1361 = vcmp.le.f32.partialorder %v1292, %v1348
        %vm1362 = vcmp.le.f32.partialorder %v1293, %v1348
        %vm1363 = vcmp.le.f32.partialorder %v1294, %v1348
        %vm1364 = vcmp.le.f32.partialorder %v1295, %v1348
        %vm1365 = vcmp.le.f32.partialorder %v1296, %v1348
        %vm1366 = vcmp.le.f32.partialorder %v1297, %v1348
        %vm1367 = vcmp.le.f32.partialorder %v1298, %v1348
        %vm1368 = vcmp.le.f32.partialorder %v1299, %v1348
        %vm1369 = vcmp.le.f32.partialorder %v1300, %v1348
        %vm1370 = vcmp.le.f32.partialorder %v1301, %v1348
        %vm1371 = vcmp.le.f32.partialorder %v1302, %v1348
        %vm1372 = vcmp.le.f32.partialorder %v1303, %v1348
        %vm1373 = vcmp.le.f32.partialorder %v1304, %v1348
        %vm1374 = vcmp.le.f32.partialorder %v1305, %v1348
        %vm1375 = vcmp.le.f32.partialorder %v1306, %v1348
        %vm1376 = vcmp.le.f32.partialorder %v1307, %v1348
        %vm1377 = vcmp.le.f32.partialorder %v1308, %v1348
        %vm1378 = vcmp.le.f32.partialorder %v1309, %v1348
        %vm1379 = vcmp.le.f32.partialorder %v1310, %v1348
        %vm1380 = vcmp.le.f32.partialorder %v1311, %v1348
        %v1381 = vsel %vm1349, 3e+38, %v1280
        %v1382 = vsel %vm1350, 3e+38, %v1281
        %v1383 = vsel %vm1351, 3e+38, %v1282
        %v1384 = vsel %vm1352, 3e+38, %v1283
        %v1385 = vsel %vm1353, 3e+38, %v1284
        %v1386 = vsel %vm1354, 3e+38, %v1285
        %v1387 = vsel %vm1355, 3e+38, %v1286
        %v1388 = vsel %vm1356, 3e+38, %v1287
        %v1389 = vsel %vm1357, 3e+38, %v1288
        %v1390 = vsel %vm1358, 3e+38, %v1289
        %v1391 = vsel %vm1359, 3e+38, %v1290
        %v1392 = vsel %vm1360, 3e+38, %v1291
        %v1393 = vsel %vm1361, 3e+38, %v1292
        %v1394 = vsel %vm1362, 3e+38, %v1293
        %v1395 = vsel %vm1363, 3e+38, %v1294
        %v1396 = vsel %vm1364, 3e+38, %v1295
        %v1397 = vsel %vm1365, 3e+38, %v1296
        %v1398 = vsel %vm1366, 3e+38, %v1297
        %v1399 = vsel %vm1367, 3e+38, %v1298
        %v1400 = vsel %vm1368, 3e+38, %v1299
        %v1401 = vsel %vm1369, 3e+38, %v1300
        %v1402 = vsel %vm1370, 3e+38, %v1301
        %v1403 = vsel %vm1371, 3e+38, %v1302
        %v1404 = vsel %vm1372, 3e+38, %v1303
        %v1405 = vsel %vm1373, 3e+38, %v1304
        %v1406 = vsel %vm1374, 3e+38, %v1305
        %v1407 = vsel %vm1375, 3e+38, %v1306
        %v1408 = vsel %vm1376, 3e+38, %v1307
        %v1409 = vsel %vm1377, 3e+38, %v1308
        %v1410 = vsel %vm1378, 3e+38, %v1309
        %v1411 = vsel %vm1379, 3e+38, %v1310
        %v1412 = vsel %vm1380, 3e+38, %v1311
        %v1413 = vmin.f32 %v1381, %v1385
        %v1414 = vmin.f32 %v1382, %v1386
        %v1415 = vmin.f32 %v1383, %v1387
        %v1416 = vmin.f32 %v1384, %v1388
        %v1417 = vmin.f32 %v1413, %v1389
        %v1418 = vmin.f32 %v1414, %v1390
        %v1419 = vmin.f32 %v1415, %v1391
        %v1420 = vmin.f32 %v1416, %v1392
        %v1421 = vmin.f32 %v1417, %v1393
        %v1422 = vmin.f32 %v1418, %v1394
        %v1423 = vmin.f32 %v1419, %v1395
        %v1424 = vmin.f32 %v1420, %v1396
        %v1425 = vmin.f32 %v1421, %v1397
        %v1426 = vmin.f32 %v1422, %v1398
        %v1427 = vmin.f32 %v1423, %v1399
        %v1428 = vmin.f32 %v1424, %v1400
        %v1429 = vmin.f32 %v1425, %v1401
        %v1430 = vmin.f32 %v1426, %v1402
        %v1431 = vmin.f32 %v1427, %v1403
        %v1432 = vmin.f32 %v1428, %v1404
        %v1433 = vmin.f32 %v1429, %v1405
        %v1434 = vmin.f32 %v1430, %v1406
        %v1435 = vmin.f32 %v1431, %v1407
        %v1436 = vmin.f32 %v1432, %v1408
        %v1437 = vmin.f32 %v1433, %v1409
        %v1438 = vmin.f32 %v1434, %v1410
        %v1439 = vmin.f32 %v1435, %v1411
        %v1440 = vmin.f32 %v1436, %v1412
        %v1441 = vmin.f32 %v1437, %v1438
        %v1442 = vmin.f32 %v1439, %v1440
        %v1443 = vmin.f32 %v1441, %v1442
        %v1444 = vrot.slane %v1443, 4
        %v1445 = vmin.f32 %v1443, %v1444
        %v1446 = vrot.slane %v1445, 2
        %v1447 = vmin.f32 %v1445, %v1446
        %v1448 = vrot.slane %v1447, 1
        %v1449 = vmin.f32 %v1447, %v1448
        %vm1450 = vcmp.le.f32.partialorder %v1381, %v1449
        %vm1451 = vcmp.le.f32.partialorder %v1382, %v1449
        %vm1452 = vcmp.le.f32.partialorder %v1383, %v1449
        %vm1453 = vcmp.le.f32.partialorder %v1384, %v1449
        %vm1454 = vcmp.le.f32.partialorder %v1385, %v1449
        %vm1455 = vcmp.le.f32.partialorder %v1386, %v1449
        %vm1456 = vcmp.le.f32.partialorder %v1387, %v1449
        %vm1457 = vcmp.le.f32.partialorder %v1388, %v1449
        %vm1458 = vcmp.le.f32.partialorder %v1389, %v1449
        %vm1459 = vcmp.le.f32.partialorder %v1390, %v1449
        %vm1460 = vcmp.le.f32.partialorder %v1391, %v1449
        %vm1461 = vcmp.le.f32.partialorder %v1392, %v1449
        %vm1462 = vcmp.le.f32.partialorder %v1393, %v1449
        %vm1463 = vcmp.le.f32.partialorder %v1394, %v1449
        %vm1464 = vcmp.le.f32.partialorder %v1395, %v1449
        %vm1465 = vcmp.le.f32.partialorder %v1396, %v1449
        %vm1466 = vcmp.le.f32.partialorder %v1397, %v1449
        %vm1467 = vcmp.le.f32.partialorder %v1398, %v1449
        %vm1468 = vcmp.le.f32.partialorder %v1399, %v1449
        %vm1469 = vcmp.le.f32.partialorder %v1400, %v1449
        %vm1470 = vcmp.le.f32.partialorder %v1401, %v1449
        %vm1471 = vcmp.le.f32.partialorder %v1402, %v1449
        %vm1472 = vcmp.le.f32.partialorder %v1403, %v1449
        %vm1473 = vcmp.le.f32.partialorder %v1404, %v1449
        %vm1474 = vcmp.le.f32.partialorder %v1405, %v1449
        %vm1475 = vcmp.le.f32.partialorder %v1406, %v1449
        %vm1476 = vcmp.le.f32.partialorder %v1407, %v1449
        %vm1477 = vcmp.le.f32.partialorder %v1408, %v1449
        %vm1478 = vcmp.le.f32.partialorder %v1409, %v1449
        %vm1479 = vcmp.le.f32.partialorder %v1410, %v1449
        %vm1480 = vcmp.le.f32.partialorder %v1411, %v1449
        %vm1481 = vcmp.le.f32.partialorder %v1412, %v1449
        %v1482 = vsel %vm1450, 3e+38, %v1381
        %v1483 = vsel %vm1451, 3e+38, %v1382
        %v1484 = vsel %vm1452, 3e+38, %v1383
        %v1485 = vsel %vm1453, 3e+38, %v1384
        %v1486 = vsel %vm1454, 3e+38, %v1385
        %v1487 = vsel %vm1455, 3e+38, %v1386
        %v1488 = vsel %vm1456, 3e+38, %v1387
        %v1489 = vsel %vm1457, 3e+38, %v1388
        %v1490 = vsel %vm1458, 3e+38, %v1389
        %v1491 = vsel %vm1459, 3e+38, %v1390
        %v1492 = vsel %vm1460, 3e+38, %v1391
        %v1493 = vsel %vm1461, 3e+38, %v1392
        %v1494 = vsel %vm1462, 3e+38, %v1393
        %v1495 = vsel %vm1463, 3e+38, %v1394
        %v1496 = vsel %vm1464, 3e+38, %v1395
        %v1497 = vsel %vm1465, 3e+38, %v1396
        %v1498 = vsel %vm1466, 3e+38, %v1397
        %v1499 = vsel %vm1467, 3e+38, %v1398
        %v1500 = vsel %vm1468, 3e+38, %v1399
        %v1501 = vsel %vm1469, 3e+38, %v1400
        %v1502 = vsel %vm1470, 3e+38, %v1401
        %v1503 = vsel %vm1471, 3e+38, %v1402
        %v1504 = vsel %vm1472, 3e+38, %v1403
        %v1505 = vsel %vm1473, 3e+38, %v1404
        %v1506 = vsel %vm1474, 3e+38, %v1405
        %v1507 = vsel %vm1475, 3e+38, %v1406
        %v1508 = vsel %vm1476, 3e+38, %v1407
        %v1509 = vsel %vm1477, 3e+38, %v1408
        %v1510 = vsel %vm1478, 3e+38, %v1409
        %v1511 = vsel %vm1479, 3e+38, %v1410
        %v1512 = vsel %vm1480, 3e+38, %v1411
        %v1513 = vsel %vm1481, 3e+38, %v1412
        %v1514 = vmin.f32 %v1482, %v1486
        %v1515 = vmin.f32 %v1483, %v1487
        %v1516 = vmin.f32 %v1484, %v1488
        %v1517 = vmin.f32 %v1485, %v1489
        %v1518 = vmin.f32 %v1514, %v1490
        %v1519 = vmin.f32 %v1515, %v1491
        %v1520 = vmin.f32 %v1516, %v1492
        %v1521 = vmin.f32 %v1517, %v1493
        %v1522 = vmin.f32 %v1518, %v1494
        %v1523 = vmin.f32 %v1519, %v1495
        %v1524 = vmin.f32 %v1520, %v1496
        %v1525 = vmin.f32 %v1521, %v1497
        %v1526 = vmin.f32 %v1522, %v1498
        %v1527 = vmin.f32 %v1523, %v1499
        %v1528 = vmin.f32 %v1524, %v1500
        %v1529 = vmin.f32 %v1525, %v1501
        %v1530 = vmin.f32 %v1526, %v1502
        %v1531 = vmin.f32 %v1527, %v1503
        %v1532 = vmin.f32 %v1528, %v1504
        %v1533 = vmin.f32 %v1529, %v1505
        %v1534 = vmin.f32 %v1530, %v1506
        %v1535 = vmin.f32 %v1531, %v1507
        %v1536 = vmin.f32 %v1532, %v1508
        %v1537 = vmin.f32 %v1533, %v1509
        %v1538 = vmin.f32 %v1534, %v1510
        %v1539 = vmin.f32 %v1535, %v1511
        %v1540 = vmin.f32 %v1536, %v1512
        %v1541 = vmin.f32 %v1537, %v1513
        %v1542 = vmin.f32 %v1538, %v1539
        %v1543 = vmin.f32 %v1540, %v1541
        %v1544 = vmin.f32 %v1542, %v1543
        %v1545 = vrot.slane %v1544, 4
        %v1546 = vmin.f32 %v1544, %v1545
        %v1547 = vrot.slane %v1546, 2
        %v1548 = vmin.f32 %v1546, %v1547
        %v1549 = vrot.slane %v1548, 1
        %v1550 = vmin.f32 %v1548, %v1549
        %vm1551 = vcmp.le.f32.partialorder %v775, %v1550
        %vm1552 = vcmp.le.f32.partialorder %v776, %v1550
        %vm1553 = vcmp.le.f32.partialorder %v777, %v1550
        %vm1554 = vcmp.le.f32.partialorder %v778, %v1550
        %vm1555 = vcmp.le.f32.partialorder %v779, %v1550
        %vm1556 = vcmp.le.f32.partialorder %v780, %v1550
        %vm1557 = vcmp.le.f32.partialorder %v781, %v1550
        %vm1558 = vcmp.le.f32.partialorder %v782, %v1550
        %vm1559 = vcmp.le.f32.partialorder %v783, %v1550
        %vm1560 = vcmp.le.f32.partialorder %v784, %v1550
        %vm1561 = vcmp.le.f32.partialorder %v785, %v1550
        %vm1562 = vcmp.le.f32.partialorder %v786, %v1550
        %vm1563 = vcmp.le.f32.partialorder %v787, %v1550
        %vm1564 = vcmp.le.f32.partialorder %v788, %v1550
        %vm1565 = vcmp.le.f32.partialorder %v789, %v1550
        %vm1566 = vcmp.le.f32.partialorder %v790, %v1550
        %vm1567 = vcmp.le.f32.partialorder %v791, %v1550
        %vm1568 = vcmp.le.f32.partialorder %v792, %v1550
        %vm1569 = vcmp.le.f32.partialorder %v793, %v1550
        %vm1570 = vcmp.le.f32.partialorder %v794, %v1550
        %vm1571 = vcmp.le.f32.partialorder %v795, %v1550
        %vm1572 = vcmp.le.f32.partialorder %v796, %v1550
        %vm1573 = vcmp.le.f32.partialorder %v797, %v1550
        %vm1574 = vcmp.le.f32.partialorder %v798, %v1550
        %vm1575 = vcmp.le.f32.partialorder %v799, %v1550
        %vm1576 = vcmp.le.f32.partialorder %v800, %v1550
        %vm1577 = vcmp.le.f32.partialorder %v801, %v1550
        %vm1578 = vcmp.le.f32.partialorder %v802, %v1550
        %vm1579 = vcmp.le.f32.partialorder %v803, %v1550
        %vm1580 = vcmp.le.f32.partialorder %v804, %v1550
        %vm1581 = vcmp.le.f32.partialorder %v805, %v1550
        %vm1582 = vcmp.le.f32.partialorder %v806, %v1550
        %v1583 = vsel %vm1551, 1, 0
        %v1584 = vsel %vm1552, 1, 0
        %v1585 = vsel %vm1553, 1, 0
        %v1586 = vsel %vm1554, 1, 0
        %v1587 = vsel %vm1555, 1, 0
        %v1588 = vsel %vm1556, 1, 0
        %v1589 = vsel %vm1557, 1, 0
        %v1590 = vsel %vm1558, 1, 0
        %v1591 = vsel %vm1559, 1, 0
        %v1592 = vsel %vm1560, 1, 0
        %v1593 = vsel %vm1561, 1, 0
        %v1594 = vsel %vm1562, 1, 0
        %v1595 = vsel %vm1563, 1, 0
        %v1596 = vsel %vm1564, 1, 0
        %v1597 = vsel %vm1565, 1, 0
        %v1598 = vsel %vm1566, 1, 0
        %v1599 = vsel %vm1567, 1, 0
        %v1600 = vsel %vm1568, 1, 0
        %v1601 = vsel %vm1569, 1, 0
        %v1602 = vsel %vm1570, 1, 0
        %v1603 = vsel %vm1571, 1, 0
        %v1604 = vsel %vm1572, 1, 0
        %v1605 = vsel %vm1573, 1, 0
        %v1606 = vsel %vm1574, 1, 0
        %v1607 = vsel %vm1575, 1, 0
        %v1608 = vsel %vm1576, 1, 0
        %v1609 = vsel %vm1577, 1, 0
        %v1610 = vsel %vm1578, 1, 0
        %v1611 = vsel %vm1579, 1, 0
        %v1612 = vsel %vm1580, 1, 0
        %v1613 = vsel %vm1581, 1, 0
        %v1614 = vsel %vm1582, 1, 0
        %v1615 = vcvt.s32.f32 %v1583
        %v1616 = vcvt.s32.f32 %v1584
        %v1617 = vcvt.s32.f32 %v1585
        %v1618 = vcvt.s32.f32 %v1586
        %v1619 = vcvt.s32.f32 %v1587
        %v1620 = vcvt.s32.f32 %v1588
        %v1621 = vcvt.s32.f32 %v1589
        %v1622 = vcvt.s32.f32 %v1590
        %v1623 = vcvt.s32.f32 %v1591
        %v1624 = vcvt.s32.f32 %v1592
        %v1625 = vcvt.s32.f32 %v1593
        %v1626 = vcvt.s32.f32 %v1594
        %v1627 = vcvt.s32.f32 %v1595
        %v1628 = vcvt.s32.f32 %v1596
        %v1629 = vcvt.s32.f32 %v1597
        %v1630 = vcvt.s32.f32 %v1598
        %v1631 = vcvt.s32.f32 %v1599
        %v1632 = vcvt.s32.f32 %v1600
        %v1633 = vcvt.s32.f32 %v1601
        %v1634 = vcvt.s32.f32 %v1602
        %v1635 = vcvt.s32.f32 %v1603
        %v1636 = vcvt.s32.f32 %v1604
        %v1637 = vcvt.s32.f32 %v1605
        %v1638 = vcvt.s32.f32 %v1606
        %v1639 = vcvt.s32.f32 %v1607
        %v1640 = vcvt.s32.f32 %v1608
        %v1641 = vcvt.s32.f32 %v1609
        %v1642 = vcvt.s32.f32 %v1610
        %v1643 = vcvt.s32.f32 %v1611
        %v1644 = vcvt.s32.f32 %v1612
        %v1645 = vcvt.s32.f32 %v1613
        %v1646 = vcvt.s32.f32 %v1614
        %v1647 = vld [vmem:[%s3] sm:$0xff]
        %v1648 = vld [vmem:[%s3 + $0x8] sm:$0xff]
        %v1649 = vld [vmem:[%s3 + $0x10] sm:$0x1]
        %v1650 = vld [vmem:[%s3 + $0x18] sm:$0x1]
        %1651 = vmatprep.subr.mxu0 0.0
        %1652 = vmatpush1.msra.mxu0 %v1630
        %1653 = vmatprep.subr.mxu0 0.0
        %1654 = vmatpush1.msra.mxu0 %v1629
        %1655 = vmatprep.subr.mxu0 0.0
        %1656 = vmatpush1.msra.mxu0 %v1628
        %1657 = vmatprep.subr.mxu0 0.0
        %1658 = vmatpush1.msra.mxu0 %v1627
        %1659 = vmatprep.subr.mxu0 0.0
        %1660 = vmatpush1.msra.mxu0 %v1626
        %1661 = vmatprep.subr.mxu0 0.0
        %1662 = vmatpush1.msra.mxu0 %v1625
        %1663 = vmatprep.subr.mxu0 0.0
        %1664 = vmatpush1.msra.mxu0 %v1624
        %1665 = vmatprep.subr.mxu0 0.0
        %1666 = vmatpush1.msra.mxu0 %v1623
        %1667 = vmatprep.subr.mxu0 0.0
        %1668 = vmatpush1.msra.mxu0 %v1622
        %1669 = vmatprep.subr.mxu0 0.0
        %1670 = vmatpush1.msra.mxu0 %v1621
        %1671 = vmatprep.subr.mxu0 0.0
        %1672 = vmatpush1.msra.mxu0 %v1620
        %1673 = vmatprep.subr.mxu0 0.0
        %1674 = vmatpush1.msra.mxu0 %v1619
        %1675 = vmatprep.subr.mxu0 0.0
        %1676 = vmatpush1.msra.mxu0 %v1618
        %1677 = vmatprep.subr.mxu0 0.0
        %1678 = vmatpush1.msra.mxu0 %v1617
        %1679 = vmatprep.subr.mxu0 0.0
        %1680 = vmatpush1.msra.mxu0 %v1616
        %1681 = vmatprep.subr.mxu0 0.0
        %1682 = vmatpush1.msra.mxu0 %v1615
        %1683 = vmatprep.subr.mxu0 0.0
        %1684 = vmatpush2.msra.mxu0 %v1646
        %1685 = vmatprep.subr.mxu0 0.0
        %1686 = vmatpush2.msra.mxu0 %v1645
        %1687 = vmatprep.subr.mxu0 0.0
        %1688 = vmatpush2.msra.mxu0 %v1644
        %1689 = vmatprep.subr.mxu0 0.0
        %1690 = vmatpush2.msra.mxu0 %v1643
        %1691 = vmatprep.subr.mxu0 0.0
        %1692 = vmatpush2.msra.mxu0 %v1642
        %1693 = vmatprep.subr.mxu0 0.0
        %1694 = vmatpush2.msra.mxu0 %v1641
        %1695 = vmatprep.subr.mxu0 0.0
        %1696 = vmatpush2.msra.mxu0 %v1640
        %1697 = vmatprep.subr.mxu0 0.0
        %1698 = vmatpush2.msra.mxu0 %v1639
        %1699 = vmatprep.subr.mxu0 0.0
        %1700 = vmatpush2.msra.mxu0 %v1638
        %1701 = vmatprep.subr.mxu0 0.0
        %1702 = vmatpush2.msra.mxu0 %v1637
        %1703 = vmatprep.subr.mxu0 0.0
        %1704 = vmatpush2.msra.mxu0 %v1636
        %1705 = vmatprep.subr.mxu0 0.0
        %1706 = vmatpush2.msra.mxu0 %v1635
        %1707 = vmatprep.subr.mxu0 0.0
        %1708 = vmatpush2.msra.mxu0 %v1634
        %1709 = vmatprep.subr.mxu0 0.0
        %1710 = vmatpush2.msra.mxu0 %v1633
        %1711 = vmatprep.subr.mxu0 0.0
        %1712 = vmatpush2.msra.mxu0 %v1632
        %1713 = vmatprep.subr.mxu0 0.0
        %1714 = vmatpush2.msra.mxu0 %v1631
        %1715 = vmatprep.mubr.f32.mxu0 %v1648
        %1716 = vmatmul.mubr.f32.gmra.mxu0 %v1647
        %v1717 = vpop.f32.mrf.mxu0
        %v1718 = vadd.f32 0.0, %v1717
        %v1719 = vpop.f32.mrf.mxu0
        %1720 = vmatprep.mubr.f32.mxu0 %v1650
        %1721 = vmatmul.mubr.f32.gmra.mxu0 %v1649
        %v1722 = vpop.f32.mrf.mxu0
        %v1723 = vadd.f32 0.0, %v1722
        %v1724 = vpop.f32.mrf.mxu0
        %1725 = vdwg.mxu0
        %v1727 = vrot.slane %v1718, 2
        %v1729 = vmul.f32 %v1718, %v1727
        %v1730 = vmul.f32 %v1718, %v1718
        %v1732 = vrot.slane %v1730, 1
        %v1734 = vsub.f32 %v1729, %v1732
        %v1736 = vrot.slane %v1734, 3
        %v1738 = vmul.f32 %v1718, %v1736
        %v1739 = vrot.slane %v1718, 4
        %v1741 = vmul.f32 %v1718, %v1739
        %v1742 = vrot.slane %v1718, 6
        %v1744 = vmul.f32 %v1718, %v1742
        %v1746 = vrot.slane %v1744, 3
        %v1748 = vsub.f32 %v1741, %v1746
        %v1749 = vmul.f32 %v1718, %v1748
        %v1751 = vrot.slane %v1749, 1
        %v1753 = vsub.f32 %v1738, %v1751
        %v1754 = vrot.slane %v1718, 3
        %v1756 = vmul.f32 %v1718, %v1754
        %v1757 = vrot.slane %v1718, 7
        %v1759 = vmul.f32 %v1718, %v1757
        %v1761 = vrot.slane %v1759, 2
        %v1763 = vsub.f32 %v1756, %v1761
        %v1765 = vrot.slane %v1763, 7
        %v1767 = vmul.f32 %v1718, %v1765
        %v1769 = vrot.slane %v1767, 2
        %v1771 = vadd.f32 %v1753, %v1769
        %v1772 = vrot.slane %v1734, 5
        %v1774 = vmul.f32 %v1718, %v1772
        %v1776 = vrot.slane %v1723, 4
        %v1778 = vmul.f32 %v1718, %v1776
        %v1780 = vrot.slane %v1778, 5
        %v1782 = vsub.f32 %v1744, %v1780
        %v1784 = vrot.slane %v1782, 6
        %v1786 = vmul.f32 %v1718, %v1784
        %v1788 = vrot.slane %v1786, 3
        %v1790 = vsub.f32 %v1774, %v1788
        %v1791 = vrot.slane %v1718, 5
        %v1793 = vmul.f32 %v1718, %v1791
        %v1794 = vrot.slane %v1723, 5
        %v1796 = vmul.f32 %v1718, %v1794
        %v1798 = vrot.slane %v1796, 4
        %v1800 = vsub.f32 %v1793, %v1798
        %v1802 = vrot.slane %v1800, 5
        %v1804 = vmul.f32 %v1718, %v1802
        %v1806 = vrot.slane %v1804, 4
        %v1808 = vadd.f32 %v1790, %v1806
        %v1809 = vrot.slane %v1782, 7
        %v1811 = vmul.f32 %v1718, %v1809
        %v1813 = vrot.slane %v1748, 3
        %v1815 = vmul.f32 %v1718, %v1813
        %v1817 = vrot.slane %v1815, 6
        %v1819 = vsub.f32 %v1811, %v1817
        %v1820 = vrot.slane %v1723, 7
        %v1822 = vmul.f32 %v1718, %v1820
        %v1824 = vrot.slane %v1756, 6
        %v1826 = vsub.f32 %v1822, %v1824
        %v1828 = vrot.slane %v1826, 7
        %v1830 = vmul.f32 %v1718, %v1828
        %v1832 = vrot.slane %v1830, 2
        %v1834 = vadd.f32 %v1819, %v1832
        %v1836 = vrot.slane %v1793, 4
        %v1838 = vsub.f32 %v1796, %v1836
        %v1840 = vrot.slane %v1838, 3
        %v1842 = vmul.f32 %v1718, %v1840
        %v1843 = vmul.f32 %v1718, %v1826
        %v1845 = vrot.slane %v1843, 1
        %v1847 = vsub.f32 %v1842, %v1845
        %v1848 = vrot.slane %v1763, 3
        %v1850 = vmul.f32 %v1718, %v1848
        %v1852 = vrot.slane %v1850, 6
        %v1854 = vadd.f32 %v1847, %v1852
        %v1855 = vrcp.pop %v1771
        %v1857 = vrot.slane %v1855, 2
        %v1859 = vmul.f32 %v1808, %v1857
        %v1860 = vmul.f32 %v1834, %v1855
        %v1861 = vmul.f32 %v1854, %v1855
        %v1862 = vrot.slane %v192, 2
        %v1864 = vmul.f32 %v1859, %v1862
        %v1865 = vrot.slane %v192, 1
        %v1867 = vmul.f32 %v1860, %v1865
        %v1869 = vrot.slane %v1867, 2
        %v1871 = vadd.f32 %v1864, %v1869
        %v1872 = vrot.slane %v192, 4
        %v1874 = vsub.f32 %v1871, %v1872
        %v1875 = vmul.f32 %v1859, %v1859
        %v1876 = vmul.f32 %v1860, %v1860
        %v1878 = vrot.slane %v1876, 2
        %v1880 = vadd.f32 %v1875, %v1878
        %v1881 = vadd.f32 %v1880, 1.0
        %v1883 = vrot.slane %v1861, 2
        %v1885 = vadd.f32 %v1874, %v1883
        %v1886 = vrcp.pop %v1881
        %v1887 = vmul.f32 %v1885, %v1886
        %v1888 = vmul.f32 %v1887, %v1887
        %v1889 = vmul.f32 %v1888, %v1881
        %v1891 = vrot.slane %v1887, 4
        %v1893 = vadd.f32 %v192, %v1891
        %v1894 = vmul.f32 %v1893, 1.442695
        %v1895 = vpow.pop %v1894
        %v1896 = vsub.f32 %v192, 5.0
        %v1897 = vrcp.pop 0.1
        %v1898 = vmul.f32 %v1896, %v1897
        %v1899 = vxor.u32 %v1898, 2147483648
        %v1900 = vmul.f32 %v1899, 1.442695
        %v1901 = vpow.pop %v1900
        %v1902 = vadd.f32 %v1901, 1.0
        %v1903 = vrcp.pop %v1902
        %v1904 = vmul.f32 1.0, %v1903
        %v1905 = vadd.f32 %v1904, 1.0
        %v1906 = vadd.f32 %v192, 5.0
        %v1907 = vmul.f32 %v1906, %v1897
        %v1908 = vxor.u32 %v1907, 2147483648
        %v1909 = vmul.f32 %v1908, 1.442695
        %v1910 = vpow.pop %v1909
        %v1911 = vadd.f32 %v1910, 1.0
        %v1912 = vrcp.pop %v1911
        %v1913 = vmul.f32 1.0, %v1912
        %v1914 = vsub.f32 %v1905, %v1913
        %v1916 = vrot.slane %v1914, 1
        %v1918 = vadd.f32 %v1914, %v1916
        %v1919 = vmul.f32 %v1895, 0.5
        %v1921 = vrot.slane %v1919, 4
        %v1923 = vadd.f32 %v1889, %v1921
        %v1924 = vmul.f32 %v1918, 2.0
        %v1926 = vrot.slane %v1924, 2
        %v1928 = vadd.f32 %v1923, %v1926
        %1929 = vst [vmem:[%s187 - $0x6] sm:$0x40] %v1928
        %s1930 = sand.u32 %s115, 1
        %s1931 = scalar_lea.sflag [#allocation3], %s1930
        %s1932 = sand.u32 %s115, 1
        %s1933 = scalar_lea.vmem [#allocation2], %s1932
        // Predicated region
        $region37: #{tpu_custom_call.1} parent=35 // pred_check
          %p1934 = pneg %p125
        $region38: #{tpu_custom_call.1} parent=35 // pred_check_branch
          %1936 = sbr.rel (%p1934) target = $region40
        $region39: #{tpu_custom_call.1} parent=35 // pred_region
          %s1938 = ssub.s32 16, 16
          %1939 = vsyncadd %s1931, %s1938
          %s1940 = smul.addr %s18, 16
          %s1941 = scalar_lea.hbm %s4, %s1940
          %s1943 = sshll.u32 %s1933, 4
          %s1944 = int_to_ptr.vmem [resolvable:$true] %s1943
          %1946 = dma.vmem_to_hbm [thread:$0]  %s1944, 16, %s1941, %s1931
        $region40: #{tpu_custom_call.1} parent=35 // pred_fallthru
          _
      $region36: #{tpu_custom_call.1} parent=5 // pred_fallthru
        _
      %p1947 = scmp.le.s32.totalorder 2, %s13
      // Predicated region
      $region41: #{tpu_custom_call.1} parent=5 // pred_check
        %p1948 = pneg %p1947
      $region42: #{tpu_custom_call.1} parent=5 // pred_check_branch
        %1950 = sbr.rel (%p1948) target = $region44
      $region43: #{tpu_custom_call.1} parent=5 // pred_region
        %s1951 = ssub.s32 %s13, 2
        // Predicated region
        $region45: #{tpu_custom_call.1} parent=43 // pred_check
          %p1952 = pneg %p131
        $region46: #{tpu_custom_call.1} parent=43 // pred_check_branch
          %1954 = sbr.rel (%p1952) target = $region48
        $region47: #{tpu_custom_call.1} parent=43 // pred_region
          %s1955 = sand.u32 %s116, 1
          %s1956 = scalar_lea.sflag [#allocation3], %s1955
          %s1957 = sand.u32 %s116, 1
          %s1958 = scalar_lea.vmem [#allocation2], %s1957
          %1959 = dma.done %s1956, 16
        $region48: #{tpu_custom_call.1} parent=43 // pred_fallthru
          _
      $region44: #{tpu_custom_call.1} parent=5 // pred_fallthru
        _
    $region6: #{tpu_custom_call.1} parent=1 // loop_footer
      %s17 = sadd.s32 1, %s13
    $region7: #{tpu_custom_call.1} parent=1 // loop_footer_branch
      %12 = sbr.rel target = $region3
    $region8: #{tpu_custom_call.1} parent=1 // loop_exit
      _
    %1960 = vsyncpa [#allocation3], 1
    %s1961 = scalar_lea.sflag [#allocation3], 1
    %1962 = vsyncpa %s1961, 1

</llo_original>
